<compile_context>
chip_gen: v5e
topology: v5e:2x2
jax: 0.10.0
libtpu: 0.0.40
codegen_flags: <defaults>
</compile_context>

<pallas_src>
import functools
import math

import jax
import jax.numpy as jnp
from jax.experimental import pallas as pl
from jax.experimental.pallas import tpu as pltpu

BN_EPS = 1e-5


def _default_vmem_limit():
    try:
        cap = pltpu.get_tpu_info().vmem_capacity_bytes
        return int(min(max(cap // 2, 32 * 1024 * 1024), 100 * 1024 * 1024))
    except Exception:
        return 48 * 1024 * 1024


_VMEM_LIMIT = _default_vmem_limit()


def _act(x, act):
    if act == "none":
        return x
    if act == "relu":
        return jnp.maximum(x, 0.0)
    if act == "silu":
        return x * jax.nn.sigmoid(x)
    if act == "sigmoid":
        return jax.nn.sigmoid(x)
    raise ValueError(act)


# ----------------------------- Pallas kernels -----------------------------

def _matmul_kernel(a_ref, b_ref, bias_ref, o_ref, *, act):
    """o = act(A @ B + bias); bf16 MXU operands, f32 accumulation + activation."""
    acc = jnp.dot(a_ref[...], b_ref[...], preferred_element_type=jnp.float32)
    acc = acc + bias_ref[...]
    o_ref[...] = _act(acc, act).astype(o_ref.dtype)


def _dwconv_kernel(x_ref, w_ref, b_ref, o_ref, *, k, act):
    """Depthwise kxk conv, stride 1, over a padded per-batch tile (f32 VPU math)."""
    # TODO(synk): realize the dj W-shift with pltpu.roll (XLU) instead of per-tap
    # sublane-offset slices once the layout cost shows up in profiles.
    ho, wo, c = o_ref.shape[1], o_ref.shape[2], o_ref.shape[3]
    acc = jnp.zeros((ho, wo, c), jnp.float32)
    for di in range(k):
        for dj in range(k):
            patch = x_ref[0, di:di + ho, dj:dj + wo, :].astype(jnp.float32)
            tap = w_ref[di, dj:dj + 1, :].astype(jnp.float32)
            acc = acc + patch * tap
    acc = acc + b_ref[0]
    o_ref[0] = _act(acc, act).astype(o_ref.dtype)


def _dwconv_strided_kernel(ph_ref, w_ref, b_ref, o_ref, *, k, stride, act):
    """Depthwise conv for stride > 1 on a polyphase-split padded tile.
    ph_ref: (1, s*s, Hph, Wph, c) where phase (pr, pc) = padded_x[pr::s, pc::s].
    Only strided output positions are computed; all slices are unit-stride."""
    ho, wo, c = o_ref.shape[1], o_ref.shape[2], o_ref.shape[3]
    acc = jnp.zeros((ho, wo, c), jnp.float32)
    for di in range(k):
        for dj in range(k):
            p = (di % stride) * stride + (dj % stride)
            oi, oj = di // stride, dj // stride
            patch = ph_ref[0, p, oi:oi + ho, oj:oj + wo, :].astype(jnp.float32)
            tap = w_ref[di, dj:dj + 1, :].astype(jnp.float32)
            acc = acc + patch * tap
    acc = acc + b_ref[0]
    o_ref[0] = _act(acc, act).astype(o_ref.dtype)


def _se_proj_kernel(*refs, has_residual, inv_hw):
    """Fused SE + projection: GAP + FC(SiLU) + FC(Sigmoid) -> per-channel scale,
    folded into the projection 1x1 matmul, with optional fused residual add."""
    if has_residual:
        x_ref, w1_ref, b1_ref, w2_ref, b2_ref, wp_ref, bp_ref, r_ref, o_ref = refs
    else:
        x_ref, w1_ref, b1_ref, w2_ref, b2_ref, wp_ref, bp_ref, o_ref = refs
    x = x_ref[0].astype(jnp.float32)                        # (hw, c_exp)
    gap = jnp.sum(x, axis=0, keepdims=True) * inv_hw        # (1, c_exp)
    z = jnp.dot(gap, w1_ref[...], preferred_element_type=jnp.float32) + b1_ref[...]
    z = z * jax.nn.sigmoid(z)                               # SiLU
    s = jnp.dot(z, w2_ref[...], preferred_element_type=jnp.float32) + b2_ref[...]
    s = jax.nn.sigmoid(s)                                   # (1, c_exp)
    xs = (x * s).astype(wp_ref.dtype)                       # scale folded, bf16 for MXU
    acc = jnp.dot(xs, wp_ref[...], preferred_element_type=jnp.float32)
    acc = acc + bp_ref[...]
    if has_residual:
        acc = acc + r_ref[0].astype(jnp.float32)
    o_ref[0] = acc.astype(o_ref.dtype)


def _head_kernel(x_ref, wc_ref, bc_ref, w1_ref, b1_ref, w2_ref, b2_ref,
                 w3_ref, b3_ref, w4_ref, b4_ref, o_ref, *, inv_hw):
    """Fused head: 1x1 conv(320->1280)+SiLU -> in-kernel global-avg-pool
    -> 3x(Linear+BN+ReLU) -> Linear(num_classes).  Gridded over batch tiles."""
    bt, hw, cin = x_ref.shape
    x = x_ref[...].reshape(bt * hw, cin)
    h = jnp.dot(x, wc_ref[...], preferred_element_type=jnp.float32) + bc_ref[...]
    h = h * jax.nn.sigmoid(h)                               # SiLU, (bt*hw, 1280) f32
    feat = jnp.sum(h.reshape(bt, hw, -1), axis=1) * inv_hw  # (bt, 1280)

    def fc(v, w_r, b_r, relu):
        y = jnp.dot(v.astype(w_r.dtype), w_r[...],
                    preferred_element_type=jnp.float32) + b_r[...]
        return jnp.maximum(y, 0.0) if relu else y

    f = fc(feat, w1_ref, b1_ref, True)
    f = fc(f, w2_ref, b2_ref, True)
    f = fc(f, w3_ref, b3_ref, True)
    o_ref[...] = fc(f, w4_ref, b4_ref, False).astype(o_ref.dtype)


# --------------------------- Pallas call wrappers --------------------------

@functools.partial(jax.jit, static_argnames=("act",))
def _linear(x, w, b, act="none"):
    """y = act(x @ w + b).  x:(M,K) bf16, w:(K,N) bf16, b:(N,) f32 -> (M,N) bf16."""
    m, k = x.shape
    n = w.shape[1]
    if m <= 1024:
        tm, mp = m, m
    else:
        tm = 512
        mp = pl.cdiv(m, tm) * tm
        if mp != m:
            x = jnp.pad(x, ((0, mp - m), (0, 0)))
    if n <= 1536:
        tn = n
    else:
        tn = next(c for c in (1024, 768, 640, 512, 384, 256, 128, n) if n % c == 0)
    bias = b.reshape(1, n)
    out = pl.pallas_call(
        functools.partial(_matmul_kernel, act=act),
        out_shape=jax.ShapeDtypeStruct((mp, n), jnp.bfloat16),
        grid=(mp // tm, n // tn),
        in_specs=[
            pl.BlockSpec((tm, k), lambda i, j: (i, 0)),
            pl.BlockSpec((k, tn), lambda i, j: (0, j)),
            pl.BlockSpec((1, tn), lambda i, j: (0, j)),
        ],
        out_specs=pl.BlockSpec((tm, tn), lambda i, j: (i, j)),
        compiler_params=pltpu.CompilerParams(
            dimension_semantics=("parallel", "parallel"),
            vmem_limit_bytes=_VMEM_LIMIT),
    )(x, w, bias)
    return out[:m] if mp != m else out


def _conv1x1(x, w, b, act="none"):
    n, h, wd, c_in = x.shape
    c_out = w.shape[1]
    y = _linear(x.reshape(n * h * wd, c_in), w, b, act=act)
    return y.reshape(n, h, wd, c_out)


@functools.partial(jax.jit, static_argnames=("k", "stride", "act"))
def _depthwise_conv(x, w, b, k, stride, act="silu"):
    """Depthwise conv, NHWC, padding (k-1)//2; only strided outputs are computed."""
    # TODO(synk): add H-row spatial tiling (with (k-1)-row halo) so grid > batch on v7x.
    n, h, wd, c = x.shape
    pad = (k - 1) // 2
    ho = (h + 2 * pad - k) // stride + 1
    wo = (wd + 2 * pad - k) // stride + 1
    bias = b.reshape(1, 1, c)
    cp = pltpu.CompilerParams(dimension_semantics=("parallel",),
                              vmem_limit_bytes=_VMEM_LIMIT)
    if stride == 1:
        xp = jnp.pad(x, ((0, 0), (pad, pad), (pad, pad), (0, 0)))
        hp, wp = h + 2 * pad, wd + 2 * pad
        return pl.pallas_call(
            functools.partial(_dwconv_kernel, k=k, act=act),
            out_shape=jax.ShapeDtypeStruct((n, ho, wo, c), jnp.bfloat16),
            grid=(n,),
            in_specs=[
                pl.BlockSpec((1, hp, wp, c), lambda i: (i, 0, 0, 0)),
                pl.BlockSpec((k, k, c), lambda i: (0, 0, 0)),
                pl.BlockSpec((1, 1, c), lambda i: (0, 0, 0)),
            ],
            out_specs=pl.BlockSpec((1, ho, wo, c), lambda i: (i, 0, 0, 0)),
            compiler_params=cp,
        )(xp, w, bias)
    # stride > 1: polyphase split of the padded input (~1x HBM traffic, unlike the old
    # k*k tap stack), then reduce over taps with unit-stride slices inside the kernel.
    s = stride
    hp, wp = h + 2 * pad, wd + 2 * pad
    hp2 = pl.cdiv(hp, s) * s
    wp2 = pl.cdiv(wp, s) * s
    hph, wph = hp2 // s, wp2 // s
    xp = jnp.pad(x, ((0, 0), (pad, pad + hp2 - hp), (pad, pad + wp2 - wp), (0, 0)))
    phases = xp.reshape(n, hph, s, wph, s, c)
    phases = jnp.transpose(phases, (0, 2, 4, 1, 3, 5)).reshape(n, s * s, hph, wph, c)
    return pl.pallas_call(
        functools.partial(_dwconv_strided_kernel, k=k, stride=s, act=act),
        out_shape=jax.ShapeDtypeStruct((n, ho, wo, c), jnp.bfloat16),
        grid=(n,),
        in_specs=[
            pl.BlockSpec((1, s * s, hph, wph, c), lambda i: (i, 0, 0, 0, 0)),
            pl.BlockSpec((k, k, c), lambda i: (0, 0, 0)),
            pl.BlockSpec((1, 1, c), lambda i: (0, 0, 0)),
        ],
        out_specs=pl.BlockSpec((1, ho, wo, c), lambda i: (i, 0, 0, 0)),
        compiler_params=cp,
    )(phases, w, bias)


@jax.jit
def _se_proj(h2, w1, b1, w2, b2, wp, bp, residual=None):
    """Fused SE (GAP + 2 FCs) + channel-scale + projection 1x1 conv (+ residual)."""
    n, hw, c = h2.shape
    csq = w1.shape[1]
    c_out = wp.shape[1]
    has_res = residual is not None
    in_specs = [
        pl.BlockSpec((1, hw, c), lambda i: (i, 0, 0)),
        pl.BlockSpec((c, csq), lambda i: (0, 0)),
        pl.BlockSpec((1, csq), lambda i: (0, 0)),
        pl.BlockSpec((csq, c), lambda i: (0, 0)),
        pl.BlockSpec((1, c), lambda i: (0, 0)),
        pl.BlockSpec((c, c_out), lambda i: (0, 0)),
        pl.BlockSpec((1, c_out), lambda i: (0, 0)),
    ]
    args = [h2, w1, b1.reshape(1, csq), w2, b2.reshape(1, c), wp,
            bp.reshape(1, c_out)]
    if has_res:
        in_specs.append(pl.BlockSpec((1, hw, c_out), lambda i: (i, 0, 0)))
        args.append(residual)
    return pl.pallas_call(
        functools.partial(_se_proj_kernel, has_residual=has_res, inv_hw=1.0 / hw),
        out_shape=jax.ShapeDtypeStruct((n, hw, c_out), jnp.bfloat16),
        grid=(n,),
        in_specs=in_specs,
        out_specs=pl.BlockSpec((1, hw, c_out), lambda i: (i, 0, 0)),
        compiler_params=pltpu.CompilerParams(dimension_semantics=("parallel",),
                                             vmem_limit_bytes=_VMEM_LIMIT),
    )(*args)


@jax.jit
def _head(x3, wc, bc, w1, b1, w2, b2, w3, b3, w4, b4):
    """Fused head conv + in-kernel GAP + feature-extractor FCs + classifier.
    Gridded over batch tiles (parallel -> megacore sharding on v7x)."""
    n, hw, cin = x3.shape
    nc = w4.shape[1]
    bt = n if n <= 16 else 8
    np_ = pl.cdiv(n, bt) * bt
    if np_ != n:
        x3 = jnp.pad(x3, ((0, np_ - n), (0, 0), (0, 0)))
    c_hd = wc.shape[1]
    out = pl.pallas_call(
        functools.partial(_head_kernel, inv_hw=1.0 / hw),
        out_shape=jax.ShapeDtypeStruct((np_, nc), jnp.float32),
        grid=(np_ // bt,),
        in_specs=[
            pl.BlockSpec((bt, hw, cin), lambda i: (i, 0, 0)),
            pl.BlockSpec((cin, c_hd), lambda i: (0, 0)),
            pl.BlockSpec((1, c_hd), lambda i: (0, 0)),
            pl.BlockSpec(w1.shape, lambda i: (0, 0)),
            pl.BlockSpec((1, w1.shape[1]), lambda i: (0, 0)),
            pl.BlockSpec(w2.shape, lambda i: (0, 0)),
            pl.BlockSpec((1, w2.shape[1]), lambda i: (0, 0)),
            pl.BlockSpec(w3.shape, lambda i: (0, 0)),
            pl.BlockSpec((1, w3.shape[1]), lambda i: (0, 0)),
            pl.BlockSpec(w4.shape, lambda i: (0, 0)),
            pl.BlockSpec((1, nc), lambda i: (0, 0)),
        ],
        out_specs=pl.BlockSpec((bt, nc), lambda i: (i, 0)),
        compiler_params=pltpu.CompilerParams(dimension_semantics=("parallel",),
                                             vmem_limit_bytes=_VMEM_LIMIT),
    )(x3, wc, bc.reshape(1, -1), w1, b1.reshape(1, -1), w2, b2.reshape(1, -1),
      w3, b3.reshape(1, -1), w4, b4.reshape(1, -1))
    return out[:n] if np_ != n else out


def _im2col(x, k, stride, pad):
    n, h, w, c = x.shape
    xp = jnp.pad(x, ((0, 0), (pad, pad), (pad, pad), (0, 0)))
    ho = (h + 2 * pad - k) // stride + 1
    wo = (w + 2 * pad - k) // stride + 1
    cols = []
    for di in range(k):
        for dj in range(k):
            cols.append(xp[:, di:di + stride * (ho - 1) + 1:stride,
                              dj:dj + stride * (wo - 1) + 1:stride, :])
    patches = jnp.concatenate(cols, axis=-1)  # (n, ho, wo, k*k*c), tap-major order
    return patches.reshape(n * ho * wo, k * k * c), (n, ho, wo)


# --------------------------- deterministic params ---------------------------

class _Init:
    """Deterministic synthetic parameter factory (BatchNorm folded, eval semantics)."""
    # TODO(synk): pretrained IMAGENET1K_V1 weights cannot be loaded in-script;
    # synthetic weights with identical shapes/semantics are used instead.

    def __init__(self, seed):
        self._key = jax.random.PRNGKey(seed)

    def key(self):
        self._key, k = jax.random.split(self._key)
        return k

    def normal(self, shape, scale):
        return scale * jax.random.normal(self.key(), shape, jnp.float32)

    def bn(self, c):
        gamma = 1.0 + 0.1 * self.normal((c,), 1.0)
        beta = 0.1 * self.normal((c,), 1.0)
        mean = 0.1 * self.normal((c,), 1.0)
        var = 1.0 + 0.05 * jax.random.uniform(self.key(), (c,), jnp.float32)
        scale = gamma / jnp.sqrt(var + BN_EPS)
        bias = beta - mean * scale
        return scale, bias

    def conv_bn(self, c_in, c_out, k=1):
        w = self.normal((k, k, c_in, c_out), 1.0 / math.sqrt(k * k * c_in))
        scale, bias = self.bn(c_out)
        w = w * scale
        if k == 1:
            w = w.reshape(c_in, c_out)
        return w.astype(jnp.bfloat16), bias

    def dwconv_bn(self, c, k):
        w = self.normal((k, k, c), 1.0 / math.sqrt(k * k))
        scale, bias = self.bn(c)
        return (w * scale).astype(jnp.bfloat16), bias

    def linear(self, c_in, c_out):
        w = self.normal((c_in, c_out), 1.0 / math.sqrt(c_in))
        b = 0.01 * self.normal((c_out,), 1.0)
        return w, b

    def linear_bn(self, c_in, c_out):
        w, b = self.linear(c_in, c_out)
        scale, bias = self.bn(c_out)
        return (w * scale).astype(jnp.bfloat16), b * scale + bias


# EfficientNet-B0 inverted-residual settings:
# (expand_ratio, kernel, stride, in_channels, out_channels, num_layers)
_B0_SETTINGS = [
    (1, 3, 1, 32, 16, 1),
    (6, 3, 2, 16, 24, 2),
    (6, 5, 2, 24, 40, 2),
    (6, 3, 2, 40, 80, 3),
    (6, 5, 1, 80, 112, 3),
    (6, 5, 2, 112, 192, 4),
    (6, 3, 1, 192, 320, 1),
]


def init_params(seed=0, num_classes=10):
    ini = _Init(seed)
    params = {}
    # stem: Conv2d(3, 32, 3, stride=2, padding=1) + BN + SiLU
    params["stem_w"], params["stem_b"] = ini.conv_bn(3, 32, k=3)
    blocks = []
    for (t, k, s, c_in, c_out, n_layers) in _B0_SETTINGS:
        for layer in range(n_layers):
            ci = c_in if layer == 0 else c_out
            stride = s if layer == 0 else 1
            c_exp = ci * t
            p = {}
            if t != 1:
                p["expand_w"], p["expand_b"] = ini.conv_bn(ci, c_exp, k=1)
            p["dw_w"], p["dw_b"] = ini.dwconv_bn(c_exp, k)
            c_sq = max(1, ci // 4)  # torchvision SqueezeExcitation: input_channels // 4
            p["se1_w"], p["se1_b"] = ini.linear(c_exp, c_sq)   # f32 (tiny)
            p["se2_w"], p["se2_b"] = ini.linear(c_sq, c_exp)   # f32 (tiny)
            p["proj_w"], p["proj_b"] = ini.conv_bn(c_exp, c_out, k=1)
            blocks.append({"expand_ratio": t, "kernel": k, "stride": stride,
                           "c_in": ci, "c_out": c_out, "params": p})
    params["blocks"] = blocks
    # head conv: Conv2d(320, 1280, 1) + BN + SiLU -> avgpool -> 1280-d features
    params["head_w"], params["head_b"] = ini.conv_bn(320, 1280, k=1)
    # feature_extractor: (Dropout, Linear, BatchNorm1d, ReLU) x3 (BN folded, Dropout=eval id)
    params["fc1_w"], params["fc1_b"] = ini.linear_bn(1280, 640)
    params["fc2_w"], params["fc2_b"] = ini.linear_bn(640, 256)
    params["fc3_w"], params["fc3_b"] = ini.linear_bn(256, 128)
    # classifier: Dropout + Linear(128, num_classes)
    params["cls_w"], params["cls_b"] = ini.linear(128, num_classes)
    params["cls_w"] = params["cls_w"].astype(jnp.bfloat16)
    return params


# ------------------------------- forward pass -------------------------------

def _mbconv(x, blk):
    p = blk["params"]
    t, k, stride = blk["expand_ratio"], blk["kernel"], blk["stride"]
    c_in, c_out = blk["c_in"], blk["c_out"]
    n, hh, ww, _ = x.shape
    h = x
    if t != 1:
        h = _conv1x1(h, p["expand_w"], p["expand_b"], act="silu")
    h = _depthwise_conv(h, p["dw_w"], p["dw_b"], k=k, stride=stride, act="silu")
    _, ho, wo, c_exp = h.shape
    h2 = h.reshape(n, ho * wo, c_exp)
    use_res = (stride == 1 and c_in == c_out)
    r = x.reshape(n, hh * ww, c_out) if use_res else None
    out = _se_proj(h2, p["se1_w"], p["se1_b"], p["se2_w"], p["se2_b"],
                   p["proj_w"], p["proj_b"], residual=r)       # (n, ho*wo, c_out)
    return out.reshape(n, ho, wo, c_out)


def efficientnet_b0_skin_tone_forward(x_nchw, params):
    """Forward pass of EfficientNetB0SkinToneClassifier (eval mode).
    Input: (N, 3, H, W) float32, NCHW like PyTorch.  Output: (N, num_classes) float32."""
    # TODO(synk): Dropout / StochasticDepth are training-time stochastic ops; eval-mode
    # identity semantics are used (matches model.eval()).
    x = jnp.transpose(x_nchw, (0, 2, 3, 1)).astype(jnp.bfloat16)  # NCHW -> NHWC, bf16
    # stem conv (im2col in JAX, bf16 matmul + BN + SiLU in the Pallas kernel)
    cols, (n, ho, wo) = _im2col(x, k=3, stride=2, pad=1)
    h = _linear(cols, params["stem_w"].reshape(-1, 32), params["stem_b"], act="silu")
    h = h.reshape(n, ho, wo, 32)
    for blk in params["blocks"]:
        h = _mbconv(h, blk)
    # fused head: 1x1 conv(320->1280)+SiLU, GAP, 3x(Linear+BN+ReLU), Linear(num_classes)
    nb, hh, ww, c_in = h.shape
    x3 = h.reshape(nb, hh * ww, c_in)
    return _head(x3,
                 params["head_w"], params["head_b"],
                 params["fc1_w"], params["fc1_b"],
                 params["fc2_w"], params["fc2_b"],
                 params["fc3_w"], params["fc3_b"],
                 params["cls_w"], params["cls_b"])


if __name__ == "__main__":
    key = jax.random.PRNGKey(0)
    x = jax.random.normal(key, (2, 3, 32, 32), jnp.float32)  # NCHW, like PyTorch input
    params = init_params(seed=0, num_classes=10)
    logits = efficientnet_b0_skin_tone_forward(x, params)
    logits = jax.block_until_ready(logits)
    assert logits.shape == (2, 10), logits.shape
    assert bool(jnp.all(jnp.isfinite(logits)))
    print("KERNEL_OK")
</pallas_src>

<mosaic_0001>
module attributes {stable_mosaic.version = 11 : i64} {
  func.func @_matmul_kernel(%arg0: i32, %arg1: i32, %arg2: memref<512x27xbf16, #tpu.memory_space<vmem>>, %arg3: memref<27x32xbf16, #tpu.memory_space<vmem>>, %arg4: memref<1x32xf32, #tpu.memory_space<vmem>>, %arg5: memref<512x32xbf16, #tpu.memory_space<vmem>>) attributes {dimension_semantics = [#tpu.dimension_semantics<parallel>, #tpu.dimension_semantics<parallel>], iteration_bounds = array<i64: 1, 1>, scalar_prefetch = 0 : i64, scratch_operands = 0 : i64, tpu.core_type = #tpu.core_type<tc>, window_params = [{transform_indices = @transform_0, window_bounds = array<i64: 512, 27>}, {transform_indices = @transform_1, window_bounds = array<i64: 27, 32>}, {transform_indices = @transform_2, window_bounds = array<i64: 1, 32>}, {transform_indices = @transform_3, window_bounds = array<i64: 512, 32>}]} {
    %c0 = arith.constant 0 : index
    %c0_0 = arith.constant 0 : index
    %0 = vector.load %arg2[%c0, %c0_0] : memref<512x27xbf16, #tpu.memory_space<vmem>>, vector<512x27xbf16>
    %c0_1 = arith.constant 0 : index
    %c0_2 = arith.constant 0 : index
    %1 = vector.load %arg3[%c0_1, %c0_2] : memref<27x32xbf16, #tpu.memory_space<vmem>>, vector<27x32xbf16>
    %cst = arith.constant dense<0.000000e+00> : vector<512x32xf32>
    %2 = tpu.matmul %0, %1, %cst {dimension_numbers = #tpu.dot_dimension_numbers<[1], [0], [0], [1], [0, 0, 1, 1], [], []>} : vector<512x27xbf16>, vector<27x32xbf16>, vector<512x32xf32> -> vector<512x32xf32>
    %c0_3 = arith.constant 0 : index
    %c0_4 = arith.constant 0 : index
    %3 = vector.load %arg4[%c0_3, %c0_4] : memref<1x32xf32, #tpu.memory_space<vmem>>, vector<1x32xf32>
    %4 = vector.broadcast %3 : vector<1x32xf32> to vector<512x32xf32>
    %5 = arith.addf %2, %4 : vector<512x32xf32>
    %6 = arith.negf %5 : vector<512x32xf32>
    %7 = math.exp %6 : vector<512x32xf32>
    %cst_5 = arith.constant 1.000000e+00 : f32
    %8 = vector.broadcast %cst_5 : f32 to vector<512x32xf32>
    %9 = arith.addf %8, %7 : vector<512x32xf32>
    %10 = arith.divf %8, %9 : vector<512x32xf32>
    %11 = arith.mulf %5, %10 : vector<512x32xf32>
    %12 = arith.truncf %11 : vector<512x32xf32> to vector<512x32xbf16>
    %c0_6 = arith.constant 0 : index
    %c0_7 = arith.constant 0 : index
    %13 = vector.load %arg5[%c0_6, %c0_7] : memref<512x32xbf16, #tpu.memory_space<vmem>>, vector<512x32xbf16>
    tpu.vector_store %arg5[%c0_6, %c0_7], %12 {strides = array<i32>} : memref<512x32xbf16, #tpu.memory_space<vmem>>, vector<512x32xbf16>,
    return
  }
  func.func @transform_0(%arg0: i32, %arg1: i32) -> (i32, i32) {
    %c0_i32 = arith.constant 0 : i32
    %c0_i32_0 = arith.constant 0 : i32
    return %arg0, %c0_i32 : i32, i32
  }
  func.func @transform_1(%arg0: i32, %arg1: i32) -> (i32, i32) {
    %c0_i32 = arith.constant 0 : i32
    %c0_i32_0 = arith.constant 0 : i32
    return %c0_i32, %arg1 : i32, i32
  }
  func.func @transform_2(%arg0: i32, %arg1: i32) -> (i32, i32) {
    %c0_i32 = arith.constant 0 : i32
    %c0_i32_0 = arith.constant 0 : i32
    return %c0_i32, %arg1 : i32, i32
  }
  func.func @transform_3(%arg0: i32, %arg1: i32) -> (i32, i32) {
    %c0_i32 = arith.constant 0 : i32
    return %arg0, %arg1 : i32, i32
  }
}

</mosaic_0001>

<llo_original>
// kernel: _linear.1
$region0: #{_linear.1}
  #allocation0 [shape = 'u32[]', space=smem, size = 0x4, offset = 0x4, fixed_abs, tag = 'smem constant byte address 0x4 - core index']
  #allocation1 [shape = 'u32[72,128]{1,0:T(1,128)}', space=vmem, size = 0x9000, scoped, tag = 'internal scratch']
  %s0 = inlined_call_operand.vmem [shape: bf16[512,27], index: 0, kind: input, shape index: {}]
  %s1 = inlined_call_operand.vmem [shape: bf16[27,32], index: 1, kind: input, shape index: {}]
  %s2 = inlined_call_operand.vmem [shape: f32[1,32], index: 2, kind: input, shape index: {}]
  %s3 = inlined_call_operand.vmem [shape: bf16[512,32], index: 3, kind: output, shape index: {}]
  %s4 = sld [smem:[#allocation0]]
  $region22: #{_linear.1} parent=0
    _
  %s6 = ssub.s32 1, %s4
  %s7 = scalar_select 0, %s6, %s4
  // Predicated region
  $region2: #{_linear.1} parent=0 // pred_check
    _
  $region3: #{_linear.1} parent=0 // pred_check_branch
    %9 = sbr.rel (0) target = $region5
  $region4: #{_linear.1} parent=0 // pred_region
    _
  $region5: #{_linear.1} parent=0 // pred_fallthru
    _
  // Predicated region
  $region6: #{_linear.1} parent=0 // pred_check
    _
  $region7: #{_linear.1} parent=0 // pred_check_branch
    %11 = sbr.rel (0) target = $region9
  $region8: #{_linear.1} parent=0 // pred_region
    _
  $region9: #{_linear.1} parent=0 // pred_fallthru
    _
  // Predicated region
  $region10: #{_linear.1} parent=0 // pred_check
    _
  $region11: #{_linear.1} parent=0 // pred_check_branch
    %13 = sbr.rel (0) target = $region13
  $region12: #{_linear.1} parent=0 // pred_region
    _
  $region13: #{_linear.1} parent=0 // pred_fallthru
    _
  %v15 = vld [vmem:[%s0] sm:$0xf]
  %v16 = vld [vmem:[%s0 + $0x4] sm:$0xf]
  %v17 = vld [vmem:[%s0 + $0x8] sm:$0xf]
  %v18 = vld [vmem:[%s0 + $0xc] sm:$0xf]
  %v19 = vld [vmem:[%s0 + $0x10] sm:$0xf]
  %v20 = vld [vmem:[%s0 + $0x14] sm:$0xf]
  %v21 = vld [vmem:[%s0 + $0x18] sm:$0xf]
  %v22 = vld [vmem:[%s0 + $0x1c] sm:$0xf]
  %v23 = vld [vmem:[%s0 + $0x20] sm:$0xf]
  %v24 = vld [vmem:[%s0 + $0x24] sm:$0xf]
  %v25 = vld [vmem:[%s0 + $0x28] sm:$0xf]
  %v26 = vld [vmem:[%s0 + $0x2c] sm:$0xf]
  %v27 = vld [vmem:[%s0 + $0x30] sm:$0xf]
  %v28 = vld [vmem:[%s0 + $0x34] sm:$0xf]
  %v29 = vld [vmem:[%s0 + $0x38] sm:$0xf]
  %v30 = vld [vmem:[%s0 + $0x3c] sm:$0xf]
  %v31 = vld [vmem:[%s0 + $0x40] sm:$0xf]
  %v32 = vld [vmem:[%s0 + $0x44] sm:$0xf]
  %v33 = vld [vmem:[%s0 + $0x48] sm:$0xf]
  %v34 = vld [vmem:[%s0 + $0x4c] sm:$0xf]
  %v35 = vld [vmem:[%s0 + $0x50] sm:$0xf]
  %v36 = vld [vmem:[%s0 + $0x54] sm:$0xf]
  %v37 = vld [vmem:[%s0 + $0x58] sm:$0xf]
  %v38 = vld [vmem:[%s0 + $0x5c] sm:$0xf]
  %v39 = vld [vmem:[%s0 + $0x60] sm:$0xf]
  %v40 = vld [vmem:[%s0 + $0x64] sm:$0xf]
  %v41 = vld [vmem:[%s0 + $0x68] sm:$0xf]
  %v42 = vld [vmem:[%s0 + $0x6c] sm:$0xf]
  %v43 = vld [vmem:[%s0 + $0x70] sm:$0xf]
  %v44 = vld [vmem:[%s0 + $0x74] sm:$0xf]
  %v45 = vld [vmem:[%s0 + $0x78] sm:$0xf]
  %v46 = vld [vmem:[%s0 + $0x7c] sm:$0xf]
  %v47 = vld [vmem:[%s0 + $0x80] sm:$0xf]
  %v48 = vld [vmem:[%s0 + $0x84] sm:$0xf]
  %v49 = vld [vmem:[%s0 + $0x88] sm:$0xf]
  %v50 = vld [vmem:[%s0 + $0x8c] sm:$0xf]
  %v51 = vld [vmem:[%s0 + $0x90] sm:$0xf]
  %v52 = vld [vmem:[%s0 + $0x94] sm:$0xf]
  %v53 = vld [vmem:[%s0 + $0x98] sm:$0xf]
  %v54 = vld [vmem:[%s0 + $0x9c] sm:$0xf]
  %v55 = vld [vmem:[%s0 + $0xa0] sm:$0xf]
  %v56 = vld [vmem:[%s0 + $0xa4] sm:$0xf]
  %v57 = vld [vmem:[%s0 + $0xa8] sm:$0xf]
  %v58 = vld [vmem:[%s0 + $0xac] sm:$0xf]
  %v59 = vld [vmem:[%s0 + $0xb0] sm:$0xf]
  %v60 = vld [vmem:[%s0 + $0xb4] sm:$0xf]
  %v61 = vld [vmem:[%s0 + $0xb8] sm:$0xf]
  %v62 = vld [vmem:[%s0 + $0xbc] sm:$0xf]
  %v63 = vld [vmem:[%s0 + $0xc0] sm:$0xf]
  %v64 = vld [vmem:[%s0 + $0xc4] sm:$0xf]
  %v65 = vld [vmem:[%s0 + $0xc8] sm:$0xf]
  %v66 = vld [vmem:[%s0 + $0xcc] sm:$0xf]
  %v67 = vld [vmem:[%s0 + $0xd0] sm:$0xf]
  %v68 = vld [vmem:[%s0 + $0xd4] sm:$0xf]
  %v69 = vld [vmem:[%s0 + $0xd8] sm:$0xf]
  %v70 = vld [vmem:[%s0 + $0xdc] sm:$0xf]
  %v71 = vld [vmem:[%s0 + $0xe0] sm:$0xf]
  %v72 = vld [vmem:[%s0 + $0xe4] sm:$0xf]
  %v73 = vld [vmem:[%s0 + $0xe8] sm:$0xf]
  %v74 = vld [vmem:[%s0 + $0xec] sm:$0xf]
  %v75 = vld [vmem:[%s0 + $0xf0] sm:$0xf]
  %v76 = vld [vmem:[%s0 + $0xf4] sm:$0xf]
  %v77 = vld [vmem:[%s0 + $0xf8] sm:$0xf]
  %v78 = vld [vmem:[%s0 + $0xfc] sm:$0xf]
  %v79 = vld [vmem:[%s1] sm:$0xf]
  %v80 = vld [vmem:[%s1 + $0x4] sm:$0xf]
  %v81 = vld [vmem:[%s1 + $0x8] sm:$0xf]
  %v82 = vld [vmem:[%s1 + $0xc] sm:$0x3]
  %v83 = vld [vmem:[%s2] sm:$0x1]
  %v85 = vperm.slane %v83, 0
  %v151 = vunpack.c.l.b16 %v15
  %v152 = vunpack.c.l.b16 %v16
  %v153 = vunpack.c.l.b16 %v17
  %v154 = vunpack.c.l.b16 %v18
  %v155 = vunpack.c.l.b16 %v19
  %v156 = vunpack.c.l.b16 %v20
  %v157 = vunpack.c.l.b16 %v21
  %v158 = vunpack.c.l.b16 %v22
  %v159 = vunpack.c.l.b16 %v23
  %v160 = vunpack.c.l.b16 %v24
  %v161 = vunpack.c.l.b16 %v25
  %v162 = vunpack.c.l.b16 %v26
  %v163 = vunpack.c.l.b16 %v27
  %v164 = vunpack.c.l.b16 %v28
  %v165 = vunpack.c.l.b16 %v29
  %v166 = vunpack.c.l.b16 %v30
  %v167 = vunpack.c.l.b16 %v31
  %v168 = vunpack.c.l.b16 %v32
  %v169 = vunpack.c.l.b16 %v33
  %v170 = vunpack.c.l.b16 %v34
  %v171 = vunpack.c.l.b16 %v35
  %v172 = vunpack.c.l.b16 %v36
  %v173 = vunpack.c.l.b16 %v37
  %v174 = vunpack.c.l.b16 %v38
  %v175 = vunpack.c.l.b16 %v39
  %v176 = vunpack.c.l.b16 %v40
  %v177 = vunpack.c.l.b16 %v41
  %v178 = vunpack.c.l.b16 %v42
  %v179 = vunpack.c.l.b16 %v43
  %v180 = vunpack.c.l.b16 %v44
  %v181 = vunpack.c.l.b16 %v45
  %v182 = vunpack.c.l.b16 %v46
  %v183 = vunpack.c.l.b16 %v47
  %v184 = vunpack.c.l.b16 %v48
  %v185 = vunpack.c.l.b16 %v49
  %v186 = vunpack.c.l.b16 %v50
  %v187 = vunpack.c.l.b16 %v51
  %v188 = vunpack.c.l.b16 %v52
  %v189 = vunpack.c.l.b16 %v53
  %v190 = vunpack.c.l.b16 %v54
  %v191 = vunpack.c.l.b16 %v55
  %v192 = vunpack.c.l.b16 %v56
  %v193 = vunpack.c.l.b16 %v57
  %v194 = vunpack.c.l.b16 %v58
  %v195 = vunpack.c.l.b16 %v59
  %v196 = vunpack.c.l.b16 %v60
  %v197 = vunpack.c.l.b16 %v61
  %v198 = vunpack.c.l.b16 %v62
  %v199 = vunpack.c.l.b16 %v63
  %v200 = vunpack.c.l.b16 %v64
  %v201 = vunpack.c.l.b16 %v65
  %v202 = vunpack.c.l.b16 %v66
  %v203 = vunpack.c.l.b16 %v67
  %v204 = vunpack.c.l.b16 %v68
  %v205 = vunpack.c.l.b16 %v69
  %v206 = vunpack.c.l.b16 %v70
  %v207 = vunpack.c.l.b16 %v71
  %v208 = vunpack.c.l.b16 %v72
  %v209 = vunpack.c.l.b16 %v73
  %v210 = vunpack.c.l.b16 %v74
  %v211 = vunpack.c.l.b16 %v75
  %v212 = vunpack.c.l.b16 %v76
  %v213 = vunpack.c.l.b16 %v77
  %v214 = vunpack.c.l.b16 %v78
  %v215 = vpack.c.b16 %v152, %v151
  %v216 = vpack.c.b16 %v154, %v153
  %v217 = vpack.c.b16 %v156, %v155
  %v218 = vpack.c.b16 %v158, %v157
  %v219 = vpack.c.b16 %v160, %v159
  %v220 = vpack.c.b16 %v162, %v161
  %v221 = vpack.c.b16 %v164, %v163
  %v222 = vpack.c.b16 %v166, %v165
  %v223 = vpack.c.b16 %v168, %v167
  %v224 = vpack.c.b16 %v170, %v169
  %v225 = vpack.c.b16 %v172, %v171
  %v226 = vpack.c.b16 %v174, %v173
  %v227 = vpack.c.b16 %v176, %v175
  %v228 = vpack.c.b16 %v178, %v177
  %v229 = vpack.c.b16 %v180, %v179
  %v230 = vpack.c.b16 %v182, %v181
  %v231 = vpack.c.b16 %v184, %v183
  %v232 = vpack.c.b16 %v186, %v185
  %v233 = vpack.c.b16 %v188, %v187
  %v234 = vpack.c.b16 %v190, %v189
  %v235 = vpack.c.b16 %v192, %v191
  %v236 = vpack.c.b16 %v194, %v193
  %v237 = vpack.c.b16 %v196, %v195
  %v238 = vpack.c.b16 %v198, %v197
  %v239 = vpack.c.b16 %v200, %v199
  %v240 = vpack.c.b16 %v202, %v201
  %v241 = vpack.c.b16 %v204, %v203
  %v242 = vpack.c.b16 %v206, %v205
  %v243 = vpack.c.b16 %v208, %v207
  %v244 = vpack.c.b16 %v210, %v209
  %v245 = vpack.c.b16 %v212, %v211
  %v246 = vpack.c.b16 %v214, %v213
  %v251 = vunpack.c.l.b16 %v79
  %v252 = vunpack.c.l.b16 %v80
  %v253 = vunpack.c.l.b16 %v81
  %v254 = vunpack.c.l.b16 %v82
  %v255 = vpack.c.b16 %v252, %v251
  %v256 = vpack.c.b16 %v254, %v253
  %vm258 = vcmask 220160
  %v260 = vsel %vm258, %v215, 0
  %v263 = vsel %vm258, %v216, 0
  %v266 = vsel %vm258, %v217, 0
  %v269 = vsel %vm258, %v218, 0
  %v272 = vsel %vm258, %v219, 0
  %v275 = vsel %vm258, %v220, 0
  %v278 = vsel %vm258, %v221, 0
  %v281 = vsel %vm258, %v222, 0
  %v284 = vsel %vm258, %v223, 0
  %v287 = vsel %vm258, %v224, 0
  %v290 = vsel %vm258, %v225, 0
  %v293 = vsel %vm258, %v226, 0
  %v296 = vsel %vm258, %v227, 0
  %v299 = vsel %vm258, %v228, 0
  %v302 = vsel %vm258, %v229, 0
  %v305 = vsel %vm258, %v230, 0
  %v308 = vsel %vm258, %v231, 0
  %v311 = vsel %vm258, %v232, 0
  %v314 = vsel %vm258, %v233, 0
  %v317 = vsel %vm258, %v234, 0
  %v320 = vsel %vm258, %v235, 0
  %v323 = vsel %vm258, %v236, 0
  %v326 = vsel %vm258, %v237, 0
  %v329 = vsel %vm258, %v238, 0
  %v332 = vsel %vm258, %v239, 0
  %v335 = vsel %vm258, %v240, 0
  %v338 = vsel %vm258, %v241, 0
  %v341 = vsel %vm258, %v242, 0
  %v344 = vsel %vm258, %v243, 0
  %v347 = vsel %vm258, %v244, 0
  %v350 = vsel %vm258, %v245, 0
  %v353 = vsel %vm258, %v246, 0
  %vm355 = vcmask 1044480
  %vm356 = vcmask 1045504
  %v357 = vsel %vm355, 4294967295, 65535
  %v358 = vsel %vm356, %v357, 0
  %v360 = vand.u32 %v256, %v358
  %362 = vmatpush.bf16.msra.mxu0 0
  %363 = vmatpush.bf16.msra.mxu0 0
  %364 = vmatpush.bf16.msra.mxu0 0
  %365 = vmatpush.bf16.msra.mxu0 0
  %366 = vmatpush.bf16.msra.mxu0 0
  %367 = vmatpush.bf16.msra.mxu0 0
  %368 = vmatpush.bf16.msra.mxu0 %v360
  %369 = vmatpush.bf16.msra.mxu0 %v255
  %370 = vmatmul.bf16.gmra.mxu0 %v260
  %v371 = vpop.f32.mrf.mxu0
  %v372 = vadd.f32 %v85, %v371
  %v373 = vpop.f32.mrf.mxu0
  %v374 = vadd.f32 %v85, %v373
  %375 = vmatmul.bf16.gmra.mxu0 %v263
  %v376 = vpop.f32.mrf.mxu0
  %v377 = vadd.f32 %v85, %v376
  %v378 = vpop.f32.mrf.mxu0
  %v379 = vadd.f32 %v85, %v378
  %380 = vmatmul.bf16.gmra.mxu0 %v266
  %v381 = vpop.f32.mrf.mxu0
  %v382 = vadd.f32 %v85, %v381
  %v383 = vpop.f32.mrf.mxu0
  %v384 = vadd.f32 %v85, %v383
  %385 = vmatmul.bf16.gmra.mxu0 %v269
  %v386 = vpop.f32.mrf.mxu0
  %v387 = vadd.f32 %v85, %v386
  %v388 = vpop.f32.mrf.mxu0
  %v389 = vadd.f32 %v85, %v388
  %390 = vmatmul.bf16.gmra.mxu0 %v272
  %v391 = vpop.f32.mrf.mxu0
  %v392 = vadd.f32 %v85, %v391
  %v393 = vpop.f32.mrf.mxu0
  %v394 = vadd.f32 %v85, %v393
  %395 = vmatmul.bf16.gmra.mxu0 %v275
  %v396 = vpop.f32.mrf.mxu0
  %v397 = vadd.f32 %v85, %v396
  %v398 = vpop.f32.mrf.mxu0
  %v399 = vadd.f32 %v85, %v398
  %400 = vmatmul.bf16.gmra.mxu0 %v278
  %v401 = vpop.f32.mrf.mxu0
  %v402 = vadd.f32 %v85, %v401
  %v403 = vpop.f32.mrf.mxu0
  %v404 = vadd.f32 %v85, %v403
  %405 = vmatmul.bf16.gmra.mxu0 %v281
  %v406 = vpop.f32.mrf.mxu0
  %v407 = vadd.f32 %v85, %v406
  %v408 = vpop.f32.mrf.mxu0
  %v409 = vadd.f32 %v85, %v408
  %410 = vmatmul.bf16.gmra.mxu0 %v284
  %v411 = vpop.f32.mrf.mxu0
  %v412 = vadd.f32 %v85, %v411
  %v413 = vpop.f32.mrf.mxu0
  %v414 = vadd.f32 %v85, %v413
  %415 = vmatmul.bf16.gmra.mxu0 %v287
  %v416 = vpop.f32.mrf.mxu0
  %v417 = vadd.f32 %v85, %v416
  %v418 = vpop.f32.mrf.mxu0
  %v419 = vadd.f32 %v85, %v418
  %420 = vmatmul.bf16.gmra.mxu0 %v290
  %v421 = vpop.f32.mrf.mxu0
  %v422 = vadd.f32 %v85, %v421
  %v423 = vpop.f32.mrf.mxu0
  %v424 = vadd.f32 %v85, %v423
  %425 = vmatmul.bf16.gmra.mxu0 %v293
  %v426 = vpop.f32.mrf.mxu0
  %v427 = vadd.f32 %v85, %v426
  %v428 = vpop.f32.mrf.mxu0
  %v429 = vadd.f32 %v85, %v428
  %430 = vmatmul.bf16.gmra.mxu0 %v296
  %v431 = vpop.f32.mrf.mxu0
  %v432 = vadd.f32 %v85, %v431
  %v433 = vpop.f32.mrf.mxu0
  %v434 = vadd.f32 %v85, %v433
  %435 = vmatmul.bf16.gmra.mxu0 %v299
  %v436 = vpop.f32.mrf.mxu0
  %v437 = vadd.f32 %v85, %v436
  %v438 = vpop.f32.mrf.mxu0
  %v439 = vadd.f32 %v85, %v438
  %440 = vmatmul.bf16.gmra.mxu0 %v302
  %v441 = vpop.f32.mrf.mxu0
  %v442 = vadd.f32 %v85, %v441
  %v443 = vpop.f32.mrf.mxu0
  %v444 = vadd.f32 %v85, %v443
  %445 = vmatmul.bf16.gmra.mxu0 %v305
  %v446 = vpop.f32.mrf.mxu0
  %v447 = vadd.f32 %v85, %v446
  %v448 = vpop.f32.mrf.mxu0
  %v449 = vadd.f32 %v85, %v448
  %450 = vmatmul.bf16.gmra.mxu0 %v308
  %v451 = vpop.f32.mrf.mxu0
  %v452 = vadd.f32 %v85, %v451
  %v453 = vpop.f32.mrf.mxu0
  %v454 = vadd.f32 %v85, %v453
  %455 = vmatmul.bf16.gmra.mxu0 %v311
  %v456 = vpop.f32.mrf.mxu0
  %v457 = vadd.f32 %v85, %v456
  %v458 = vpop.f32.mrf.mxu0
  %v459 = vadd.f32 %v85, %v458
  %460 = vmatmul.bf16.gmra.mxu0 %v314
  %v461 = vpop.f32.mrf.mxu0
  %v462 = vadd.f32 %v85, %v461
  %v463 = vpop.f32.mrf.mxu0
  %v464 = vadd.f32 %v85, %v463
  %465 = vmatmul.bf16.gmra.mxu0 %v317
  %v466 = vpop.f32.mrf.mxu0
  %v467 = vadd.f32 %v85, %v466
  %v468 = vpop.f32.mrf.mxu0
  %v469 = vadd.f32 %v85, %v468
  %470 = vmatmul.bf16.gmra.mxu0 %v320
  %v471 = vpop.f32.mrf.mxu0
  %v472 = vadd.f32 %v85, %v471
  %v473 = vpop.f32.mrf.mxu0
  %v474 = vadd.f32 %v85, %v473
  %475 = vmatmul.bf16.gmra.mxu0 %v323
  %v476 = vpop.f32.mrf.mxu0
  %v477 = vadd.f32 %v85, %v476
  %v478 = vpop.f32.mrf.mxu0
  %v479 = vadd.f32 %v85, %v478
  %480 = vmatmul.bf16.gmra.mxu0 %v326
  %v481 = vpop.f32.mrf.mxu0
  %v482 = vadd.f32 %v85, %v481
  %v483 = vpop.f32.mrf.mxu0
  %v484 = vadd.f32 %v85, %v483
  %485 = vmatmul.bf16.gmra.mxu0 %v329
  %v486 = vpop.f32.mrf.mxu0
  %v487 = vadd.f32 %v85, %v486
  %v488 = vpop.f32.mrf.mxu0
  %v489 = vadd.f32 %v85, %v488
  %490 = vmatmul.bf16.gmra.mxu0 %v332
  %v491 = vpop.f32.mrf.mxu0
  %v492 = vadd.f32 %v85, %v491
  %v493 = vpop.f32.mrf.mxu0
  %v494 = vadd.f32 %v85, %v493
  %495 = vmatmul.bf16.gmra.mxu0 %v335
  %v496 = vpop.f32.mrf.mxu0
  %v497 = vadd.f32 %v85, %v496
  %v498 = vpop.f32.mrf.mxu0
  %v499 = vadd.f32 %v85, %v498
  %500 = vmatmul.bf16.gmra.mxu0 %v338
  %v501 = vpop.f32.mrf.mxu0
  %v502 = vadd.f32 %v85, %v501
  %v503 = vpop.f32.mrf.mxu0
  %v504 = vadd.f32 %v85, %v503
  %505 = vmatmul.bf16.gmra.mxu0 %v341
  %v506 = vpop.f32.mrf.mxu0
  %v507 = vadd.f32 %v85, %v506
  %v508 = vpop.f32.mrf.mxu0
  %v509 = vadd.f32 %v85, %v508
  %510 = vmatmul.bf16.gmra.mxu0 %v344
  %v511 = vpop.f32.mrf.mxu0
  %v512 = vadd.f32 %v85, %v511
  %v513 = vpop.f32.mrf.mxu0
  %v514 = vadd.f32 %v85, %v513
  %515 = vmatmul.bf16.gmra.mxu0 %v347
  %v516 = vpop.f32.mrf.mxu0
  %v517 = vadd.f32 %v85, %v516
  %v518 = vpop.f32.mrf.mxu0
  %v519 = vadd.f32 %v85, %v518
  %520 = vmatmul.bf16.gmra.mxu0 %v350
  %v521 = vpop.f32.mrf.mxu0
  %v522 = vadd.f32 %v85, %v521
  %v523 = vpop.f32.mrf.mxu0
  %v524 = vadd.f32 %v85, %v523
  %525 = vmatmul.bf16.gmra.mxu0 %v353
  %v526 = vpop.f32.mrf.mxu0
  %v527 = vadd.f32 %v85, %v526
  %v528 = vpop.f32.mrf.mxu0
  %v529 = vadd.f32 %v85, %v528
  %530 = vdwg.mxu0
  %v531 = vxor.u32 %v372, 2147483648
  %v532 = vxor.u32 %v374, 2147483648
  %v533 = vxor.u32 %v377, 2147483648
  %v534 = vxor.u32 %v379, 2147483648
  %v535 = vxor.u32 %v382, 2147483648
  %v536 = vxor.u32 %v384, 2147483648
  %v537 = vxor.u32 %v387, 2147483648
  %v538 = vxor.u32 %v389, 2147483648
  %v539 = vxor.u32 %v392, 2147483648
  %v540 = vxor.u32 %v394, 2147483648
  %v541 = vxor.u32 %v397, 2147483648
  %v542 = vxor.u32 %v399, 2147483648
  %v543 = vxor.u32 %v402, 2147483648
  %v544 = vxor.u32 %v404, 2147483648
  %v545 = vxor.u32 %v407, 2147483648
  %v546 = vxor.u32 %v409, 2147483648
  %v547 = vxor.u32 %v412, 2147483648
  %v548 = vxor.u32 %v414, 2147483648
  %v549 = vxor.u32 %v417, 2147483648
  %v550 = vxor.u32 %v419, 2147483648
  %v551 = vxor.u32 %v422, 2147483648
  %v552 = vxor.u32 %v424, 2147483648
  %v553 = vxor.u32 %v427, 2147483648
  %v554 = vxor.u32 %v429, 2147483648
  %v555 = vxor.u32 %v432, 2147483648
  %v556 = vxor.u32 %v434, 2147483648
  %v557 = vxor.u32 %v437, 2147483648
  %v558 = vxor.u32 %v439, 2147483648
  %v559 = vxor.u32 %v442, 2147483648
  %v560 = vxor.u32 %v444, 2147483648
  %v561 = vxor.u32 %v447, 2147483648
  %v562 = vxor.u32 %v449, 2147483648
  %v563 = vxor.u32 %v452, 2147483648
  %v564 = vxor.u32 %v454, 2147483648
  %v565 = vxor.u32 %v457, 2147483648
  %v566 = vxor.u32 %v459, 2147483648
  %v567 = vxor.u32 %v462, 2147483648
  %v568 = vxor.u32 %v464, 2147483648
  %v569 = vxor.u32 %v467, 2147483648
  %v570 = vxor.u32 %v469, 2147483648
  %v571 = vxor.u32 %v472, 2147483648
  %v572 = vxor.u32 %v474, 2147483648
  %v573 = vxor.u32 %v477, 2147483648
  %v574 = vxor.u32 %v479, 2147483648
  %v575 = vxor.u32 %v482, 2147483648
  %v576 = vxor.u32 %v484, 2147483648
  %v577 = vxor.u32 %v487, 2147483648
  %v578 = vxor.u32 %v489, 2147483648
  %v579 = vxor.u32 %v492, 2147483648
  %v580 = vxor.u32 %v494, 2147483648
  %v581 = vxor.u32 %v497, 2147483648
  %v582 = vxor.u32 %v499, 2147483648
  %v583 = vxor.u32 %v502, 2147483648
  %v584 = vxor.u32 %v504, 2147483648
  %v585 = vxor.u32 %v507, 2147483648
  %v586 = vxor.u32 %v509, 2147483648
  %v587 = vxor.u32 %v512, 2147483648
  %v588 = vxor.u32 %v514, 2147483648
  %v589 = vxor.u32 %v517, 2147483648
  %v590 = vxor.u32 %v519, 2147483648
  %v591 = vxor.u32 %v522, 2147483648
  %v592 = vxor.u32 %v524, 2147483648
  %v593 = vxor.u32 %v527, 2147483648
  %v594 = vxor.u32 %v529, 2147483648
  %v595 = vmul.f32 %v531, 1.442695
  %v596 = vpow.pop %v595
  %v597 = vmul.f32 %v532, 1.442695
  %v598 = vpow.pop %v597
  %v599 = vmul.f32 %v533, 1.442695
  %v600 = vpow.pop %v599
  %v601 = vmul.f32 %v534, 1.442695
  %v602 = vpow.pop %v601
  %v603 = vmul.f32 %v535, 1.442695
  %v604 = vpow.pop %v603
  %v605 = vmul.f32 %v536, 1.442695
  %v606 = vpow.pop %v605
  %v607 = vmul.f32 %v537, 1.442695
  %v608 = vpow.pop %v607
  %v609 = vmul.f32 %v538, 1.442695
  %v610 = vpow.pop %v609
  %v611 = vmul.f32 %v539, 1.442695
  %v612 = vpow.pop %v611
  %v613 = vmul.f32 %v540, 1.442695
  %v614 = vpow.pop %v613
  %v615 = vmul.f32 %v541, 1.442695
  %v616 = vpow.pop %v615
  %v617 = vmul.f32 %v542, 1.442695
  %v618 = vpow.pop %v617
  %v619 = vmul.f32 %v543, 1.442695
  %v620 = vpow.pop %v619
  %v621 = vmul.f32 %v544, 1.442695
  %v622 = vpow.pop %v621
  %v623 = vmul.f32 %v545, 1.442695
  %v624 = vpow.pop %v623
  %v625 = vmul.f32 %v546, 1.442695
  %v626 = vpow.pop %v625
  %v627 = vmul.f32 %v547, 1.442695
  %v628 = vpow.pop %v627
  %v629 = vmul.f32 %v548, 1.442695
  %v630 = vpow.pop %v629
  %v631 = vmul.f32 %v549, 1.442695
  %v632 = vpow.pop %v631
  %v633 = vmul.f32 %v550, 1.442695
  %v634 = vpow.pop %v633
  %v635 = vmul.f32 %v551, 1.442695
  %v636 = vpow.pop %v635
  %v637 = vmul.f32 %v552, 1.442695
  %v638 = vpow.pop %v637
  %v639 = vmul.f32 %v553, 1.442695
  %v640 = vpow.pop %v639
  %v641 = vmul.f32 %v554, 1.442695
  %v642 = vpow.pop %v641
  %v643 = vmul.f32 %v555, 1.442695
  %v644 = vpow.pop %v643
  %v645 = vmul.f32 %v556, 1.442695
  %v646 = vpow.pop %v645
  %v647 = vmul.f32 %v557, 1.442695
  %v648 = vpow.pop %v647
  %v649 = vmul.f32 %v558, 1.442695
  %v650 = vpow.pop %v649
  %v651 = vmul.f32 %v559, 1.442695
  %v652 = vpow.pop %v651
  %v653 = vmul.f32 %v560, 1.442695
  %v654 = vpow.pop %v653
  %v655 = vmul.f32 %v561, 1.442695
  %v656 = vpow.pop %v655
  %v657 = vmul.f32 %v562, 1.442695
  %v658 = vpow.pop %v657
  %v659 = vmul.f32 %v563, 1.442695
  %v660 = vpow.pop %v659
  %v661 = vmul.f32 %v564, 1.442695
  %v662 = vpow.pop %v661
  %v663 = vmul.f32 %v565, 1.442695
  %v664 = vpow.pop %v663
  %v665 = vmul.f32 %v566, 1.442695
  %v666 = vpow.pop %v665
  %v667 = vmul.f32 %v567, 1.442695
  %v668 = vpow.pop %v667
  %v669 = vmul.f32 %v568, 1.442695
  %v670 = vpow.pop %v669
  %v671 = vmul.f32 %v569, 1.442695
  %v672 = vpow.pop %v671
  %v673 = vmul.f32 %v570, 1.442695
  %v674 = vpow.pop %v673
  %v675 = vmul.f32 %v571, 1.442695
  %v676 = vpow.pop %v675
  %v677 = vmul.f32 %v572, 1.442695
  %v678 = vpow.pop %v677
  %v679 = vmul.f32 %v573, 1.442695
  %v680 = vpow.pop %v679
  %v681 = vmul.f32 %v574, 1.442695
  %v682 = vpow.pop %v681
  %v683 = vmul.f32 %v575, 1.442695
  %v684 = vpow.pop %v683
  %v685 = vmul.f32 %v576, 1.442695
  %v686 = vpow.pop %v685
  %v687 = vmul.f32 %v577, 1.442695
  %v688 = vpow.pop %v687
  %v689 = vmul.f32 %v578, 1.442695
  %v690 = vpow.pop %v689
  %v691 = vmul.f32 %v579, 1.442695
  %v692 = vpow.pop %v691
  %v693 = vmul.f32 %v580, 1.442695
  %v694 = vpow.pop %v693
  %v695 = vmul.f32 %v581, 1.442695
  %v696 = vpow.pop %v695
  %v697 = vmul.f32 %v582, 1.442695
  %v698 = vpow.pop %v697
  %v699 = vmul.f32 %v583, 1.442695
  %v700 = vpow.pop %v699
  %v701 = vmul.f32 %v584, 1.442695
  %v702 = vpow.pop %v701
  %v703 = vmul.f32 %v585, 1.442695
  %v704 = vpow.pop %v703
  %v705 = vmul.f32 %v586, 1.442695
  %v706 = vpow.pop %v705
  %v707 = vmul.f32 %v587, 1.442695
  %v708 = vpow.pop %v707
  %v709 = vmul.f32 %v588, 1.442695
  %v710 = vpow.pop %v709
  %v711 = vmul.f32 %v589, 1.442695
  %v712 = vpow.pop %v711
  %v713 = vmul.f32 %v590, 1.442695
  %v714 = vpow.pop %v713
  %v715 = vmul.f32 %v591, 1.442695
  %v716 = vpow.pop %v715
  %v717 = vmul.f32 %v592, 1.442695
  %v718 = vpow.pop %v717
  %v719 = vmul.f32 %v593, 1.442695
  %v720 = vpow.pop %v719
  %v721 = vmul.f32 %v594, 1.442695
  %v722 = vpow.pop %v721
  %v723 = vadd.f32 %v596, 1.0
  %v724 = vadd.f32 %v598, 1.0
  %v725 = vadd.f32 %v600, 1.0
  %v726 = vadd.f32 %v602, 1.0
  %v727 = vadd.f32 %v604, 1.0
  %v728 = vadd.f32 %v606, 1.0
  %v729 = vadd.f32 %v608, 1.0
  %v730 = vadd.f32 %v610, 1.0
  %v731 = vadd.f32 %v612, 1.0
  %v732 = vadd.f32 %v614, 1.0
  %v733 = vadd.f32 %v616, 1.0
  %v734 = vadd.f32 %v618, 1.0
  %v735 = vadd.f32 %v620, 1.0
  %v736 = vadd.f32 %v622, 1.0
  %v737 = vadd.f32 %v624, 1.0
  %v738 = vadd.f32 %v626, 1.0
  %v739 = vadd.f32 %v628, 1.0
  %v740 = vadd.f32 %v630, 1.0
  %v741 = vadd.f32 %v632, 1.0
  %v742 = vadd.f32 %v634, 1.0
  %v743 = vadd.f32 %v636, 1.0
  %v744 = vadd.f32 %v638, 1.0
  %v745 = vadd.f32 %v640, 1.0
  %v746 = vadd.f32 %v642, 1.0
  %v747 = vadd.f32 %v644, 1.0
  %v748 = vadd.f32 %v646, 1.0
  %v749 = vadd.f32 %v648, 1.0
  %v750 = vadd.f32 %v650, 1.0
  %v751 = vadd.f32 %v652, 1.0
  %v752 = vadd.f32 %v654, 1.0
  %v753 = vadd.f32 %v656, 1.0
  %v754 = vadd.f32 %v658, 1.0
  %v755 = vadd.f32 %v660, 1.0
  %v756 = vadd.f32 %v662, 1.0
  %v757 = vadd.f32 %v664, 1.0
  %v758 = vadd.f32 %v666, 1.0
  %v759 = vadd.f32 %v668, 1.0
  %v760 = vadd.f32 %v670, 1.0
  %v761 = vadd.f32 %v672, 1.0
  %v762 = vadd.f32 %v674, 1.0
  %v763 = vadd.f32 %v676, 1.0
  %v764 = vadd.f32 %v678, 1.0
  %v765 = vadd.f32 %v680, 1.0
  %v766 = vadd.f32 %v682, 1.0
  %v767 = vadd.f32 %v684, 1.0
  %v768 = vadd.f32 %v686, 1.0
  %v769 = vadd.f32 %v688, 1.0
  %v770 = vadd.f32 %v690, 1.0
  %v771 = vadd.f32 %v692, 1.0
  %v772 = vadd.f32 %v694, 1.0
  %v773 = vadd.f32 %v696, 1.0
  %v774 = vadd.f32 %v698, 1.0
  %v775 = vadd.f32 %v700, 1.0
  %v776 = vadd.f32 %v702, 1.0
  %v777 = vadd.f32 %v704, 1.0
  %v778 = vadd.f32 %v706, 1.0
  %v779 = vadd.f32 %v708, 1.0
  %v780 = vadd.f32 %v710, 1.0
  %v781 = vadd.f32 %v712, 1.0
  %v782 = vadd.f32 %v714, 1.0
  %v783 = vadd.f32 %v716, 1.0
  %v784 = vadd.f32 %v718, 1.0
  %v785 = vadd.f32 %v720, 1.0
  %v786 = vadd.f32 %v722, 1.0
  %v787 = vrcp.pop %v723
  %v788 = vmul.f32 %v723, %v787
  %v789 = vsub.f32 1.0, %v788
  %v790 = vmul.f32 %v787, %v789
  %v791 = vadd.f32 %v787, %v790
  %vm792 = vweird.f32 %v723
  %vm793 = vweird.f32 %v787
  %vm794 = vmor %vm792, %vm793
  %v795 = vsel %vm794, %v787, %v791
  %v796 = vand.u32 2147483647, %v723
  %vm797 = vcmp.eq.f32.partialorder %v796, 8.507059e+37
  %v798 = vand.u32 %v723, 2147483648
  %v799 = vor.u32 1.1754944e-38, %v798
  %v800 = vsel %vm797, %v799, %v795
  %v801 = vmul.f32 1.0, %v800
  %v802 = vrcp.pop %v724
  %v803 = vmul.f32 %v724, %v802
  %v804 = vsub.f32 1.0, %v803
  %v805 = vmul.f32 %v802, %v804
  %v806 = vadd.f32 %v802, %v805
  %vm807 = vweird.f32 %v724
  %vm808 = vweird.f32 %v802
  %vm809 = vmor %vm807, %vm808
  %v810 = vsel %vm809, %v802, %v806
  %v811 = vand.u32 2147483647, %v724
  %vm812 = vcmp.eq.f32.partialorder %v811, 8.507059e+37
  %v813 = vand.u32 %v724, 2147483648
  %v814 = vor.u32 1.1754944e-38, %v813
  %v815 = vsel %vm812, %v814, %v810
  %v816 = vmul.f32 1.0, %v815
  %v817 = vrcp.pop %v725
  %v818 = vmul.f32 %v725, %v817
  %v819 = vsub.f32 1.0, %v818
  %v820 = vmul.f32 %v817, %v819
  %v821 = vadd.f32 %v817, %v820
  %vm822 = vweird.f32 %v725
  %vm823 = vweird.f32 %v817
  %vm824 = vmor %vm822, %vm823
  %v825 = vsel %vm824, %v817, %v821
  %v826 = vand.u32 2147483647, %v725
  %vm827 = vcmp.eq.f32.partialorder %v826, 8.507059e+37
  %v828 = vand.u32 %v725, 2147483648
  %v829 = vor.u32 1.1754944e-38, %v828
  %v830 = vsel %vm827, %v829, %v825
  %v831 = vmul.f32 1.0, %v830
  %v832 = vrcp.pop %v726
  %v833 = vmul.f32 %v726, %v832
  %v834 = vsub.f32 1.0, %v833
  %v835 = vmul.f32 %v832, %v834
  %v836 = vadd.f32 %v832, %v835
  %vm837 = vweird.f32 %v726
  %vm838 = vweird.f32 %v832
  %vm839 = vmor %vm837, %vm838
  %v840 = vsel %vm839, %v832, %v836
  %v841 = vand.u32 2147483647, %v726
  %vm842 = vcmp.eq.f32.partialorder %v841, 8.507059e+37
  %v843 = vand.u32 %v726, 2147483648
  %v844 = vor.u32 1.1754944e-38, %v843
  %v845 = vsel %vm842, %v844, %v840
  %v846 = vmul.f32 1.0, %v845
  %v847 = vrcp.pop %v727
  %v848 = vmul.f32 %v727, %v847
  %v849 = vsub.f32 1.0, %v848
  %v850 = vmul.f32 %v847, %v849
  %v851 = vadd.f32 %v847, %v850
  %vm852 = vweird.f32 %v727
  %vm853 = vweird.f32 %v847
  %vm854 = vmor %vm852, %vm853
  %v855 = vsel %vm854, %v847, %v851
  %v856 = vand.u32 2147483647, %v727
  %vm857 = vcmp.eq.f32.partialorder %v856, 8.507059e+37
  %v858 = vand.u32 %v727, 2147483648
  %v859 = vor.u32 1.1754944e-38, %v858
  %v860 = vsel %vm857, %v859, %v855
  %v861 = vmul.f32 1.0, %v860
  %v862 = vrcp.pop %v728
  %v863 = vmul.f32 %v728, %v862
  %v864 = vsub.f32 1.0, %v863
  %v865 = vmul.f32 %v862, %v864
  %v866 = vadd.f32 %v862, %v865
  %vm867 = vweird.f32 %v728
  %vm868 = vweird.f32 %v862
  %vm869 = vmor %vm867, %vm868
  %v870 = vsel %vm869, %v862, %v866
  %v871 = vand.u32 2147483647, %v728
  %vm872 = vcmp.eq.f32.partialorder %v871, 8.507059e+37
  %v873 = vand.u32 %v728, 2147483648
  %v874 = vor.u32 1.1754944e-38, %v873
  %v875 = vsel %vm872, %v874, %v870
  %v876 = vmul.f32 1.0, %v875
  %v877 = vrcp.pop %v729
  %v878 = vmul.f32 %v729, %v877
  %v879 = vsub.f32 1.0, %v878
  %v880 = vmul.f32 %v877, %v879
  %v881 = vadd.f32 %v877, %v880
  %vm882 = vweird.f32 %v729
  %vm883 = vweird.f32 %v877
  %vm884 = vmor %vm882, %vm883
  %v885 = vsel %vm884, %v877, %v881
  %v886 = vand.u32 2147483647, %v729
  %vm887 = vcmp.eq.f32.partialorder %v886, 8.507059e+37
  %v888 = vand.u32 %v729, 2147483648
  %v889 = vor.u32 1.1754944e-38, %v888
  %v890 = vsel %vm887, %v889, %v885
  %v891 = vmul.f32 1.0, %v890
  %v892 = vrcp.pop %v730
  %v893 = vmul.f32 %v730, %v892
  %v894 = vsub.f32 1.0, %v893
  %v895 = vmul.f32 %v892, %v894
  %v896 = vadd.f32 %v892, %v895
  %vm897 = vweird.f32 %v730
  %vm898 = vweird.f32 %v892
  %vm899 = vmor %vm897, %vm898
  %v900 = vsel %vm899, %v892, %v896
  %v901 = vand.u32 2147483647, %v730
  %vm902 = vcmp.eq.f32.partialorder %v901, 8.507059e+37
  %v903 = vand.u32 %v730, 2147483648
  %v904 = vor.u32 1.1754944e-38, %v903
  %v905 = vsel %vm902, %v904, %v900
  %v906 = vmul.f32 1.0, %v905
  %v907 = vrcp.pop %v731
  %v908 = vmul.f32 %v731, %v907
  %v909 = vsub.f32 1.0, %v908
  %v910 = vmul.f32 %v907, %v909
  %v911 = vadd.f32 %v907, %v910
  %vm912 = vweird.f32 %v731
  %vm913 = vweird.f32 %v907
  %vm914 = vmor %vm912, %vm913
  %v915 = vsel %vm914, %v907, %v911
  %v916 = vand.u32 2147483647, %v731
  %vm917 = vcmp.eq.f32.partialorder %v916, 8.507059e+37
  %v918 = vand.u32 %v731, 2147483648
  %v919 = vor.u32 1.1754944e-38, %v918
  %v920 = vsel %vm917, %v919, %v915
  %v921 = vmul.f32 1.0, %v920
  %v922 = vrcp.pop %v732
  %v923 = vmul.f32 %v732, %v922
  %v924 = vsub.f32 1.0, %v923
  %v925 = vmul.f32 %v922, %v924
  %v926 = vadd.f32 %v922, %v925
  %vm927 = vweird.f32 %v732
  %vm928 = vweird.f32 %v922
  %vm929 = vmor %vm927, %vm928
  %v930 = vsel %vm929, %v922, %v926
  %v931 = vand.u32 2147483647, %v732
  %vm932 = vcmp.eq.f32.partialorder %v931, 8.507059e+37
  %v933 = vand.u32 %v732, 2147483648
  %v934 = vor.u32 1.1754944e-38, %v933
  %v935 = vsel %vm932, %v934, %v930
  %v936 = vmul.f32 1.0, %v935
  %v937 = vrcp.pop %v733
  %v938 = vmul.f32 %v733, %v937
  %v939 = vsub.f32 1.0, %v938
  %v940 = vmul.f32 %v937, %v939
  %v941 = vadd.f32 %v937, %v940
  %vm942 = vweird.f32 %v733
  %vm943 = vweird.f32 %v937
  %vm944 = vmor %vm942, %vm943
  %v945 = vsel %vm944, %v937, %v941
  %v946 = vand.u32 2147483647, %v733
  %vm947 = vcmp.eq.f32.partialorder %v946, 8.507059e+37
  %v948 = vand.u32 %v733, 2147483648
  %v949 = vor.u32 1.1754944e-38, %v948
  %v950 = vsel %vm947, %v949, %v945
  %v951 = vmul.f32 1.0, %v950
  %v952 = vrcp.pop %v734
  %v953 = vmul.f32 %v734, %v952
  %v954 = vsub.f32 1.0, %v953
  %v955 = vmul.f32 %v952, %v954
  %v956 = vadd.f32 %v952, %v955
  %vm957 = vweird.f32 %v734
  %vm958 = vweird.f32 %v952
  %vm959 = vmor %vm957, %vm958
  %v960 = vsel %vm959, %v952, %v956
  %v961 = vand.u32 2147483647, %v734
  %vm962 = vcmp.eq.f32.partialorder %v961, 8.507059e+37
  %v963 = vand.u32 %v734, 2147483648
  %v964 = vor.u32 1.1754944e-38, %v963
  %v965 = vsel %vm962, %v964, %v960
  %v966 = vmul.f32 1.0, %v965
  %v967 = vrcp.pop %v735
  %v968 = vmul.f32 %v735, %v967
  %v969 = vsub.f32 1.0, %v968
  %v970 = vmul.f32 %v967, %v969
  %v971 = vadd.f32 %v967, %v970
  %vm972 = vweird.f32 %v735
  %vm973 = vweird.f32 %v967
  %vm974 = vmor %vm972, %vm973
  %v975 = vsel %vm974, %v967, %v971
  %v976 = vand.u32 2147483647, %v735
  %vm977 = vcmp.eq.f32.partialorder %v976, 8.507059e+37
  %v978 = vand.u32 %v735, 2147483648
  %v979 = vor.u32 1.1754944e-38, %v978
  %v980 = vsel %vm977, %v979, %v975
  %v981 = vmul.f32 1.0, %v980
  %v982 = vrcp.pop %v736
  %v983 = vmul.f32 %v736, %v982
  %v984 = vsub.f32 1.0, %v983
  %v985 = vmul.f32 %v982, %v984
  %v986 = vadd.f32 %v982, %v985
  %vm987 = vweird.f32 %v736
  %vm988 = vweird.f32 %v982
  %vm989 = vmor %vm987, %vm988
  %v990 = vsel %vm989, %v982, %v986
  %v991 = vand.u32 2147483647, %v736
  %vm992 = vcmp.eq.f32.partialorder %v991, 8.507059e+37
  %v993 = vand.u32 %v736, 2147483648
  %v994 = vor.u32 1.1754944e-38, %v993
  %v995 = vsel %vm992, %v994, %v990
  %v996 = vmul.f32 1.0, %v995
  %v997 = vrcp.pop %v737
  %v998 = vmul.f32 %v737, %v997
  %v999 = vsub.f32 1.0, %v998
  %v1000 = vmul.f32 %v997, %v999
  %v1001 = vadd.f32 %v997, %v1000
  %vm1002 = vweird.f32 %v737
  %vm1003 = vweird.f32 %v997
  %vm1004 = vmor %vm1002, %vm1003
  %v1005 = vsel %vm1004, %v997, %v1001
  %v1006 = vand.u32 2147483647, %v737
  %vm1007 = vcmp.eq.f32.partialorder %v1006, 8.507059e+37
  %v1008 = vand.u32 %v737, 2147483648
  %v1009 = vor.u32 1.1754944e-38, %v1008
  %v1010 = vsel %vm1007, %v1009, %v1005
  %v1011 = vmul.f32 1.0, %v1010
  %v1012 = vrcp.pop %v738
  %v1013 = vmul.f32 %v738, %v1012
  %v1014 = vsub.f32 1.0, %v1013
  %v1015 = vmul.f32 %v1012, %v1014
  %v1016 = vadd.f32 %v1012, %v1015
  %vm1017 = vweird.f32 %v738
  %vm1018 = vweird.f32 %v1012
  %vm1019 = vmor %vm1017, %vm1018
  %v1020 = vsel %vm1019, %v1012, %v1016
  %v1021 = vand.u32 2147483647, %v738
  %vm1022 = vcmp.eq.f32.partialorder %v1021, 8.507059e+37
  %v1023 = vand.u32 %v738, 2147483648
  %v1024 = vor.u32 1.1754944e-38, %v1023
  %v1025 = vsel %vm1022, %v1024, %v1020
  %v1026 = vmul.f32 1.0, %v1025
  %v1027 = vrcp.pop %v739
  %v1028 = vmul.f32 %v739, %v1027
  %v1029 = vsub.f32 1.0, %v1028
  %v1030 = vmul.f32 %v1027, %v1029
  %v1031 = vadd.f32 %v1027, %v1030
  %vm1032 = vweird.f32 %v739
  %vm1033 = vweird.f32 %v1027
  %vm1034 = vmor %vm1032, %vm1033
  %v1035 = vsel %vm1034, %v1027, %v1031
  %v1036 = vand.u32 2147483647, %v739
  %vm1037 = vcmp.eq.f32.partialorder %v1036, 8.507059e+37
  %v1038 = vand.u32 %v739, 2147483648
  %v1039 = vor.u32 1.1754944e-38, %v1038
  %v1040 = vsel %vm1037, %v1039, %v1035
  %v1041 = vmul.f32 1.0, %v1040
  %v1042 = vrcp.pop %v740
  %v1043 = vmul.f32 %v740, %v1042
  %v1044 = vsub.f32 1.0, %v1043
  %v1045 = vmul.f32 %v1042, %v1044
  %v1046 = vadd.f32 %v1042, %v1045
  %vm1047 = vweird.f32 %v740
  %vm1048 = vweird.f32 %v1042
  %vm1049 = vmor %vm1047, %vm1048
  %v1050 = vsel %vm1049, %v1042, %v1046
  %v1051 = vand.u32 2147483647, %v740
  %vm1052 = vcmp.eq.f32.partialorder %v1051, 8.507059e+37
  %v1053 = vand.u32 %v740, 2147483648
  %v1054 = vor.u32 1.1754944e-38, %v1053
  %v1055 = vsel %vm1052, %v1054, %v1050
  %v1056 = vmul.f32 1.0, %v1055
  %v1057 = vrcp.pop %v741
  %v1058 = vmul.f32 %v741, %v1057
  %v1059 = vsub.f32 1.0, %v1058
  %v1060 = vmul.f32 %v1057, %v1059
  %v1061 = vadd.f32 %v1057, %v1060
  %vm1062 = vweird.f32 %v741
  %vm1063 = vweird.f32 %v1057
  %vm1064 = vmor %vm1062, %vm1063
  %v1065 = vsel %vm1064, %v1057, %v1061
  %v1066 = vand.u32 2147483647, %v741
  %vm1067 = vcmp.eq.f32.partialorder %v1066, 8.507059e+37
  %v1068 = vand.u32 %v741, 2147483648
  %v1069 = vor.u32 1.1754944e-38, %v1068
  %v1070 = vsel %vm1067, %v1069, %v1065
  %v1071 = vmul.f32 1.0, %v1070
  %v1072 = vrcp.pop %v742
  %v1073 = vmul.f32 %v742, %v1072
  %v1074 = vsub.f32 1.0, %v1073
  %v1075 = vmul.f32 %v1072, %v1074
  %v1076 = vadd.f32 %v1072, %v1075
  %vm1077 = vweird.f32 %v742
  %vm1078 = vweird.f32 %v1072
  %vm1079 = vmor %vm1077, %vm1078
  %v1080 = vsel %vm1079, %v1072, %v1076
  %v1081 = vand.u32 2147483647, %v742
  %vm1082 = vcmp.eq.f32.partialorder %v1081, 8.507059e+37
  %v1083 = vand.u32 %v742, 2147483648
  %v1084 = vor.u32 1.1754944e-38, %v1083
  %v1085 = vsel %vm1082, %v1084, %v1080
  %v1086 = vmul.f32 1.0, %v1085
  %v1087 = vrcp.pop %v743
  %v1088 = vmul.f32 %v743, %v1087
  %v1089 = vsub.f32 1.0, %v1088
  %v1090 = vmul.f32 %v1087, %v1089
  %v1091 = vadd.f32 %v1087, %v1090
  %vm1092 = vweird.f32 %v743
  %vm1093 = vweird.f32 %v1087
  %vm1094 = vmor %vm1092, %vm1093
  %v1095 = vsel %vm1094, %v1087, %v1091
  %v1096 = vand.u32 2147483647, %v743
  %vm1097 = vcmp.eq.f32.partialorder %v1096, 8.507059e+37
  %v1098 = vand.u32 %v743, 2147483648
  %v1099 = vor.u32 1.1754944e-38, %v1098
  %v1100 = vsel %vm1097, %v1099, %v1095
  %v1101 = vmul.f32 1.0, %v1100
  %v1102 = vrcp.pop %v744
  %v1103 = vmul.f32 %v744, %v1102
  %v1104 = vsub.f32 1.0, %v1103
  %v1105 = vmul.f32 %v1102, %v1104
  %v1106 = vadd.f32 %v1102, %v1105
  %vm1107 = vweird.f32 %v744
  %vm1108 = vweird.f32 %v1102
  %vm1109 = vmor %vm1107, %vm1108
  %v1110 = vsel %vm1109, %v1102, %v1106
  %v1111 = vand.u32 2147483647, %v744
  %vm1112 = vcmp.eq.f32.partialorder %v1111, 8.507059e+37
  %v1113 = vand.u32 %v744, 2147483648
  %v1114 = vor.u32 1.1754944e-38, %v1113
  %v1115 = vsel %vm1112, %v1114, %v1110
  %v1116 = vmul.f32 1.0, %v1115
  %v1117 = vrcp.pop %v745
  %v1118 = vmul.f32 %v745, %v1117
  %v1119 = vsub.f32 1.0, %v1118
  %v1120 = vmul.f32 %v1117, %v1119
  %v1121 = vadd.f32 %v1117, %v1120
  %vm1122 = vweird.f32 %v745
  %vm1123 = vweird.f32 %v1117
  %vm1124 = vmor %vm1122, %vm1123
  %v1125 = vsel %vm1124, %v1117, %v1121
  %v1126 = vand.u32 2147483647, %v745
  %vm1127 = vcmp.eq.f32.partialorder %v1126, 8.507059e+37
  %v1128 = vand.u32 %v745, 2147483648
  %v1129 = vor.u32 1.1754944e-38, %v1128
  %v1130 = vsel %vm1127, %v1129, %v1125
  %v1131 = vmul.f32 1.0, %v1130
  %v1132 = vrcp.pop %v746
  %v1133 = vmul.f32 %v746, %v1132
  %v1134 = vsub.f32 1.0, %v1133
  %v1135 = vmul.f32 %v1132, %v1134
  %v1136 = vadd.f32 %v1132, %v1135
  %vm1137 = vweird.f32 %v746
  %vm1138 = vweird.f32 %v1132
  %vm1139 = vmor %vm1137, %vm1138
  %v1140 = vsel %vm1139, %v1132, %v1136
  %v1141 = vand.u32 2147483647, %v746
  %vm1142 = vcmp.eq.f32.partialorder %v1141, 8.507059e+37
  %v1143 = vand.u32 %v746, 2147483648
  %v1144 = vor.u32 1.1754944e-38, %v1143
  %v1145 = vsel %vm1142, %v1144, %v1140
  %v1146 = vmul.f32 1.0, %v1145
  %v1147 = vrcp.pop %v747
  %v1148 = vmul.f32 %v747, %v1147
  %v1149 = vsub.f32 1.0, %v1148
  %v1150 = vmul.f32 %v1147, %v1149
  %v1151 = vadd.f32 %v1147, %v1150
  %vm1152 = vweird.f32 %v747
  %vm1153 = vweird.f32 %v1147
  %vm1154 = vmor %vm1152, %vm1153
  %v1155 = vsel %vm1154, %v1147, %v1151
  %v1156 = vand.u32 2147483647, %v747
  %vm1157 = vcmp.eq.f32.partialorder %v1156, 8.507059e+37
  %v1158 = vand.u32 %v747, 2147483648
  %v1159 = vor.u32 1.1754944e-38, %v1158
  %v1160 = vsel %vm1157, %v1159, %v1155
  %v1161 = vmul.f32 1.0, %v1160
  %v1162 = vrcp.pop %v748
  %v1163 = vmul.f32 %v748, %v1162
  %v1164 = vsub.f32 1.0, %v1163
  %v1165 = vmul.f32 %v1162, %v1164
  %v1166 = vadd.f32 %v1162, %v1165
  %vm1167 = vweird.f32 %v748
  %vm1168 = vweird.f32 %v1162
  %vm1169 = vmor %vm1167, %vm1168
  %v1170 = vsel %vm1169, %v1162, %v1166
  %v1171 = vand.u32 2147483647, %v748
  %vm1172 = vcmp.eq.f32.partialorder %v1171, 8.507059e+37
  %v1173 = vand.u32 %v748, 2147483648
  %v1174 = vor.u32 1.1754944e-38, %v1173
  %v1175 = vsel %vm1172, %v1174, %v1170
  %v1176 = vmul.f32 1.0, %v1175
  %v1177 = vrcp.pop %v749
  %v1178 = vmul.f32 %v749, %v1177
  %v1179 = vsub.f32 1.0, %v1178
  %v1180 = vmul.f32 %v1177, %v1179
  %v1181 = vadd.f32 %v1177, %v1180
  %vm1182 = vweird.f32 %v749
  %vm1183 = vweird.f32 %v1177
  %vm1184 = vmor %vm1182, %vm1183
  %v1185 = vsel %vm1184, %v1177, %v1181
  %v1186 = vand.u32 2147483647, %v749
  %vm1187 = vcmp.eq.f32.partialorder %v1186, 8.507059e+37
  %v1188 = vand.u32 %v749, 2147483648
  %v1189 = vor.u32 1.1754944e-38, %v1188
  %v1190 = vsel %vm1187, %v1189, %v1185
  %v1191 = vmul.f32 1.0, %v1190
  %v1192 = vrcp.pop %v750
  %v1193 = vmul.f32 %v750, %v1192
  %v1194 = vsub.f32 1.0, %v1193
  %v1195 = vmul.f32 %v1192, %v1194
  %v1196 = vadd.f32 %v1192, %v1195
  %vm1197 = vweird.f32 %v750
  %vm1198 = vweird.f32 %v1192
  %vm1199 = vmor %vm1197, %vm1198
  %v1200 = vsel %vm1199, %v1192, %v1196
  %v1201 = vand.u32 2147483647, %v750
  %vm1202 = vcmp.eq.f32.partialorder %v1201, 8.507059e+37
  %v1203 = vand.u32 %v750, 2147483648
  %v1204 = vor.u32 1.1754944e-38, %v1203
  %v1205 = vsel %vm1202, %v1204, %v1200
  %v1206 = vmul.f32 1.0, %v1205
  %v1207 = vrcp.pop %v751
  %v1208 = vmul.f32 %v751, %v1207
  %v1209 = vsub.f32 1.0, %v1208
  %v1210 = vmul.f32 %v1207, %v1209
  %v1211 = vadd.f32 %v1207, %v1210
  %vm1212 = vweird.f32 %v751
  %vm1213 = vweird.f32 %v1207
  %vm1214 = vmor %vm1212, %vm1213
  %v1215 = vsel %vm1214, %v1207, %v1211
  %v1216 = vand.u32 2147483647, %v751
  %vm1217 = vcmp.eq.f32.partialorder %v1216, 8.507059e+37
  %v1218 = vand.u32 %v751, 2147483648
  %v1219 = vor.u32 1.1754944e-38, %v1218
  %v1220 = vsel %vm1217, %v1219, %v1215
  %v1221 = vmul.f32 1.0, %v1220
  %v1222 = vrcp.pop %v752
  %v1223 = vmul.f32 %v752, %v1222
  %v1224 = vsub.f32 1.0, %v1223
  %v1225 = vmul.f32 %v1222, %v1224
  %v1226 = vadd.f32 %v1222, %v1225
  %vm1227 = vweird.f32 %v752
  %vm1228 = vweird.f32 %v1222
  %vm1229 = vmor %vm1227, %vm1228
  %v1230 = vsel %vm1229, %v1222, %v1226
  %v1231 = vand.u32 2147483647, %v752
  %vm1232 = vcmp.eq.f32.partialorder %v1231, 8.507059e+37
  %v1233 = vand.u32 %v752, 2147483648
  %v1234 = vor.u32 1.1754944e-38, %v1233
  %v1235 = vsel %vm1232, %v1234, %v1230
  %v1236 = vmul.f32 1.0, %v1235
  %v1237 = vrcp.pop %v753
  %v1238 = vmul.f32 %v753, %v1237
  %v1239 = vsub.f32 1.0, %v1238
  %v1240 = vmul.f32 %v1237, %v1239
  %v1241 = vadd.f32 %v1237, %v1240
  %vm1242 = vweird.f32 %v753
  %vm1243 = vweird.f32 %v1237
  %vm1244 = vmor %vm1242, %vm1243
  %v1245 = vsel %vm1244, %v1237, %v1241
  %v1246 = vand.u32 2147483647, %v753
  %vm1247 = vcmp.eq.f32.partialorder %v1246, 8.507059e+37
  %v1248 = vand.u32 %v753, 2147483648
  %v1249 = vor.u32 1.1754944e-38, %v1248
  %v1250 = vsel %vm1247, %v1249, %v1245
  %v1251 = vmul.f32 1.0, %v1250
  %v1252 = vrcp.pop %v754
  %v1253 = vmul.f32 %v754, %v1252
  %v1254 = vsub.f32 1.0, %v1253
  %v1255 = vmul.f32 %v1252, %v1254
  %v1256 = vadd.f32 %v1252, %v1255
  %vm1257 = vweird.f32 %v754
  %vm1258 = vweird.f32 %v1252
  %vm1259 = vmor %vm1257, %vm1258
  %v1260 = vsel %vm1259, %v1252, %v1256
  %v1261 = vand.u32 2147483647, %v754
  %vm1262 = vcmp.eq.f32.partialorder %v1261, 8.507059e+37
  %v1263 = vand.u32 %v754, 2147483648
  %v1264 = vor.u32 1.1754944e-38, %v1263
  %v1265 = vsel %vm1262, %v1264, %v1260
  %v1266 = vmul.f32 1.0, %v1265
  %v1267 = vrcp.pop %v755
  %v1268 = vmul.f32 %v755, %v1267
  %v1269 = vsub.f32 1.0, %v1268
  %v1270 = vmul.f32 %v1267, %v1269
  %v1271 = vadd.f32 %v1267, %v1270
  %vm1272 = vweird.f32 %v755
  %vm1273 = vweird.f32 %v1267
  %vm1274 = vmor %vm1272, %vm1273
  %v1275 = vsel %vm1274, %v1267, %v1271
  %v1276 = vand.u32 2147483647, %v755
  %vm1277 = vcmp.eq.f32.partialorder %v1276, 8.507059e+37
  %v1278 = vand.u32 %v755, 2147483648
  %v1279 = vor.u32 1.1754944e-38, %v1278
  %v1280 = vsel %vm1277, %v1279, %v1275
  %v1281 = vmul.f32 1.0, %v1280
  %v1282 = vrcp.pop %v756
  %v1283 = vmul.f32 %v756, %v1282
  %v1284 = vsub.f32 1.0, %v1283
  %v1285 = vmul.f32 %v1282, %v1284
  %v1286 = vadd.f32 %v1282, %v1285
  %vm1287 = vweird.f32 %v756
  %vm1288 = vweird.f32 %v1282
  %vm1289 = vmor %vm1287, %vm1288
  %v1290 = vsel %vm1289, %v1282, %v1286
  %v1291 = vand.u32 2147483647, %v756
  %vm1292 = vcmp.eq.f32.partialorder %v1291, 8.507059e+37
  %v1293 = vand.u32 %v756, 2147483648
  %v1294 = vor.u32 1.1754944e-38, %v1293
  %v1295 = vsel %vm1292, %v1294, %v1290
  %v1296 = vmul.f32 1.0, %v1295
  %v1297 = vrcp.pop %v757
  %v1298 = vmul.f32 %v757, %v1297
  %v1299 = vsub.f32 1.0, %v1298
  %v1300 = vmul.f32 %v1297, %v1299
  %v1301 = vadd.f32 %v1297, %v1300
  %vm1302 = vweird.f32 %v757
  %vm1303 = vweird.f32 %v1297
  %vm1304 = vmor %vm1302, %vm1303
  %v1305 = vsel %vm1304, %v1297, %v1301
  %v1306 = vand.u32 2147483647, %v757
  %vm1307 = vcmp.eq.f32.partialorder %v1306, 8.507059e+37
  %v1308 = vand.u32 %v757, 2147483648
  %v1309 = vor.u32 1.1754944e-38, %v1308
  %v1310 = vsel %vm1307, %v1309, %v1305
  %v1311 = vmul.f32 1.0, %v1310
  %v1312 = vrcp.pop %v758
  %v1313 = vmul.f32 %v758, %v1312
  %v1314 = vsub.f32 1.0, %v1313
  %v1315 = vmul.f32 %v1312, %v1314
  %v1316 = vadd.f32 %v1312, %v1315
  %vm1317 = vweird.f32 %v758
  %vm1318 = vweird.f32 %v1312
  %vm1319 = vmor %vm1317, %vm1318
  %v1320 = vsel %vm1319, %v1312, %v1316
  %v1321 = vand.u32 2147483647, %v758
  %vm1322 = vcmp.eq.f32.partialorder %v1321, 8.507059e+37
  %v1323 = vand.u32 %v758, 2147483648
  %v1324 = vor.u32 1.1754944e-38, %v1323
  %v1325 = vsel %vm1322, %v1324, %v1320
  %v1326 = vmul.f32 1.0, %v1325
  %v1327 = vrcp.pop %v759
  %v1328 = vmul.f32 %v759, %v1327
  %v1329 = vsub.f32 1.0, %v1328
  %v1330 = vmul.f32 %v1327, %v1329
  %v1331 = vadd.f32 %v1327, %v1330
  %vm1332 = vweird.f32 %v759
  %vm1333 = vweird.f32 %v1327
  %vm1334 = vmor %vm1332, %vm1333
  %v1335 = vsel %vm1334, %v1327, %v1331
  %v1336 = vand.u32 2147483647, %v759
  %vm1337 = vcmp.eq.f32.partialorder %v1336, 8.507059e+37
  %v1338 = vand.u32 %v759, 2147483648
  %v1339 = vor.u32 1.1754944e-38, %v1338
  %v1340 = vsel %vm1337, %v1339, %v1335
  %v1341 = vmul.f32 1.0, %v1340
  %v1342 = vrcp.pop %v760
  %v1343 = vmul.f32 %v760, %v1342
  %v1344 = vsub.f32 1.0, %v1343
  %v1345 = vmul.f32 %v1342, %v1344
  %v1346 = vadd.f32 %v1342, %v1345
  %vm1347 = vweird.f32 %v760
  %vm1348 = vweird.f32 %v1342
  %vm1349 = vmor %vm1347, %vm1348
  %v1350 = vsel %vm1349, %v1342, %v1346
  %v1351 = vand.u32 2147483647, %v760
  %vm1352 = vcmp.eq.f32.partialorder %v1351, 8.507059e+37
  %v1353 = vand.u32 %v760, 2147483648
  %v1354 = vor.u32 1.1754944e-38, %v1353
  %v1355 = vsel %vm1352, %v1354, %v1350
  %v1356 = vmul.f32 1.0, %v1355
  %v1357 = vrcp.pop %v761
  %v1358 = vmul.f32 %v761, %v1357
  %v1359 = vsub.f32 1.0, %v1358
  %v1360 = vmul.f32 %v1357, %v1359
  %v1361 = vadd.f32 %v1357, %v1360
  %vm1362 = vweird.f32 %v761
  %vm1363 = vweird.f32 %v1357
  %vm1364 = vmor %vm1362, %vm1363
  %v1365 = vsel %vm1364, %v1357, %v1361
  %v1366 = vand.u32 2147483647, %v761
  %vm1367 = vcmp.eq.f32.partialorder %v1366, 8.507059e+37
  %v1368 = vand.u32 %v761, 2147483648
  %v1369 = vor.u32 1.1754944e-38, %v1368
  %v1370 = vsel %vm1367, %v1369, %v1365
  %v1371 = vmul.f32 1.0, %v1370
  %v1372 = vrcp.pop %v762
  %v1373 = vmul.f32 %v762, %v1372
  %v1374 = vsub.f32 1.0, %v1373
  %v1375 = vmul.f32 %v1372, %v1374
  %v1376 = vadd.f32 %v1372, %v1375
  %vm1377 = vweird.f32 %v762
  %vm1378 = vweird.f32 %v1372
  %vm1379 = vmor %vm1377, %vm1378
  %v1380 = vsel %vm1379, %v1372, %v1376
  %v1381 = vand.u32 2147483647, %v762
  %vm1382 = vcmp.eq.f32.partialorder %v1381, 8.507059e+37
  %v1383 = vand.u32 %v762, 2147483648
  %v1384 = vor.u32 1.1754944e-38, %v1383
  %v1385 = vsel %vm1382, %v1384, %v1380
  %v1386 = vmul.f32 1.0, %v1385
  %v1387 = vrcp.pop %v763
  %v1388 = vmul.f32 %v763, %v1387
  %v1389 = vsub.f32 1.0, %v1388
  %v1390 = vmul.f32 %v1387, %v1389
  %v1391 = vadd.f32 %v1387, %v1390
  %vm1392 = vweird.f32 %v763
  %vm1393 = vweird.f32 %v1387
  %vm1394 = vmor %vm1392, %vm1393
  %v1395 = vsel %vm1394, %v1387, %v1391
  %v1396 = vand.u32 2147483647, %v763
  %vm1397 = vcmp.eq.f32.partialorder %v1396, 8.507059e+37
  %v1398 = vand.u32 %v763, 2147483648
  %v1399 = vor.u32 1.1754944e-38, %v1398
  %v1400 = vsel %vm1397, %v1399, %v1395
  %v1401 = vmul.f32 1.0, %v1400
  %v1402 = vrcp.pop %v764
  %v1403 = vmul.f32 %v764, %v1402
  %v1404 = vsub.f32 1.0, %v1403
  %v1405 = vmul.f32 %v1402, %v1404
  %v1406 = vadd.f32 %v1402, %v1405
  %vm1407 = vweird.f32 %v764
  %vm1408 = vweird.f32 %v1402
  %vm1409 = vmor %vm1407, %vm1408
  %v1410 = vsel %vm1409, %v1402, %v1406
  %v1411 = vand.u32 2147483647, %v764
  %vm1412 = vcmp.eq.f32.partialorder %v1411, 8.507059e+37
  %v1413 = vand.u32 %v764, 2147483648
  %v1414 = vor.u32 1.1754944e-38, %v1413
  %v1415 = vsel %vm1412, %v1414, %v1410
  %v1416 = vmul.f32 1.0, %v1415
  %v1417 = vrcp.pop %v765
  %v1418 = vmul.f32 %v765, %v1417
  %v1419 = vsub.f32 1.0, %v1418
  %v1420 = vmul.f32 %v1417, %v1419
  %v1421 = vadd.f32 %v1417, %v1420
  %vm1422 = vweird.f32 %v765
  %vm1423 = vweird.f32 %v1417
  %vm1424 = vmor %vm1422, %vm1423
  %v1425 = vsel %vm1424, %v1417, %v1421
  %v1426 = vand.u32 2147483647, %v765
  %vm1427 = vcmp.eq.f32.partialorder %v1426, 8.507059e+37
  %v1428 = vand.u32 %v765, 2147483648
  %v1429 = vor.u32 1.1754944e-38, %v1428
  %v1430 = vsel %vm1427, %v1429, %v1425
  %v1431 = vmul.f32 1.0, %v1430
  %v1432 = vrcp.pop %v766
  %v1433 = vmul.f32 %v766, %v1432
  %v1434 = vsub.f32 1.0, %v1433
  %v1435 = vmul.f32 %v1432, %v1434
  %v1436 = vadd.f32 %v1432, %v1435
  %vm1437 = vweird.f32 %v766
  %vm1438 = vweird.f32 %v1432
  %vm1439 = vmor %vm1437, %vm1438
  %v1440 = vsel %vm1439, %v1432, %v1436
  %v1441 = vand.u32 2147483647, %v766
  %vm1442 = vcmp.eq.f32.partialorder %v1441, 8.507059e+37
  %v1443 = vand.u32 %v766, 2147483648
  %v1444 = vor.u32 1.1754944e-38, %v1443
  %v1445 = vsel %vm1442, %v1444, %v1440
  %v1446 = vmul.f32 1.0, %v1445
  %v1447 = vrcp.pop %v767
  %v1448 = vmul.f32 %v767, %v1447
  %v1449 = vsub.f32 1.0, %v1448
  %v1450 = vmul.f32 %v1447, %v1449
  %v1451 = vadd.f32 %v1447, %v1450
  %vm1452 = vweird.f32 %v767
  %vm1453 = vweird.f32 %v1447
  %vm1454 = vmor %vm1452, %vm1453
  %v1455 = vsel %vm1454, %v1447, %v1451
  %v1456 = vand.u32 2147483647, %v767
  %vm1457 = vcmp.eq.f32.partialorder %v1456, 8.507059e+37
  %v1458 = vand.u32 %v767, 2147483648
  %v1459 = vor.u32 1.1754944e-38, %v1458
  %v1460 = vsel %vm1457, %v1459, %v1455
  %v1461 = vmul.f32 1.0, %v1460
  %v1462 = vrcp.pop %v768
  %v1463 = vmul.f32 %v768, %v1462
  %v1464 = vsub.f32 1.0, %v1463
  %v1465 = vmul.f32 %v1462, %v1464
  %v1466 = vadd.f32 %v1462, %v1465
  %vm1467 = vweird.f32 %v768
  %vm1468 = vweird.f32 %v1462
  %vm1469 = vmor %vm1467, %vm1468
  %v1470 = vsel %vm1469, %v1462, %v1466
  %v1471 = vand.u32 2147483647, %v768
  %vm1472 = vcmp.eq.f32.partialorder %v1471, 8.507059e+37
  %v1473 = vand.u32 %v768, 2147483648
  %v1474 = vor.u32 1.1754944e-38, %v1473
  %v1475 = vsel %vm1472, %v1474, %v1470
  %v1476 = vmul.f32 1.0, %v1475
  %v1477 = vrcp.pop %v769
  %v1478 = vmul.f32 %v769, %v1477
  %v1479 = vsub.f32 1.0, %v1478
  %v1480 = vmul.f32 %v1477, %v1479
  %v1481 = vadd.f32 %v1477, %v1480
  %vm1482 = vweird.f32 %v769
  %vm1483 = vweird.f32 %v1477
  %vm1484 = vmor %vm1482, %vm1483
  %v1485 = vsel %vm1484, %v1477, %v1481
  %v1486 = vand.u32 2147483647, %v769
  %vm1487 = vcmp.eq.f32.partialorder %v1486, 8.507059e+37
  %v1488 = vand.u32 %v769, 2147483648
  %v1489 = vor.u32 1.1754944e-38, %v1488
  %v1490 = vsel %vm1487, %v1489, %v1485
  %v1491 = vmul.f32 1.0, %v1490
  %v1492 = vrcp.pop %v770
  %v1493 = vmul.f32 %v770, %v1492
  %v1494 = vsub.f32 1.0, %v1493
  %v1495 = vmul.f32 %v1492, %v1494
  %v1496 = vadd.f32 %v1492, %v1495
  %vm1497 = vweird.f32 %v770
  %vm1498 = vweird.f32 %v1492
  %vm1499 = vmor %vm1497, %vm1498
  %v1500 = vsel %vm1499, %v1492, %v1496
  %v1501 = vand.u32 2147483647, %v770
  %vm1502 = vcmp.eq.f32.partialorder %v1501, 8.507059e+37
  %v1503 = vand.u32 %v770, 2147483648
  %v1504 = vor.u32 1.1754944e-38, %v1503
  %v1505 = vsel %vm1502, %v1504, %v1500
  %v1506 = vmul.f32 1.0, %v1505
  %v1507 = vrcp.pop %v771
  %v1508 = vmul.f32 %v771, %v1507
  %v1509 = vsub.f32 1.0, %v1508
  %v1510 = vmul.f32 %v1507, %v1509
  %v1511 = vadd.f32 %v1507, %v1510
  %vm1512 = vweird.f32 %v771
  %vm1513 = vweird.f32 %v1507
  %vm1514 = vmor %vm1512, %vm1513
  %v1515 = vsel %vm1514, %v1507, %v1511
  %v1516 = vand.u32 2147483647, %v771
  %vm1517 = vcmp.eq.f32.partialorder %v1516, 8.507059e+37
  %v1518 = vand.u32 %v771, 2147483648
  %v1519 = vor.u32 1.1754944e-38, %v1518
  %v1520 = vsel %vm1517, %v1519, %v1515
  %v1521 = vmul.f32 1.0, %v1520
  %v1522 = vrcp.pop %v772
  %v1523 = vmul.f32 %v772, %v1522
  %v1524 = vsub.f32 1.0, %v1523
  %v1525 = vmul.f32 %v1522, %v1524
  %v1526 = vadd.f32 %v1522, %v1525
  %vm1527 = vweird.f32 %v772
  %vm1528 = vweird.f32 %v1522
  %vm1529 = vmor %vm1527, %vm1528
  %v1530 = vsel %vm1529, %v1522, %v1526
  %v1531 = vand.u32 2147483647, %v772
  %vm1532 = vcmp.eq.f32.partialorder %v1531, 8.507059e+37
  %v1533 = vand.u32 %v772, 2147483648
  %v1534 = vor.u32 1.1754944e-38, %v1533
  %v1535 = vsel %vm1532, %v1534, %v1530
  %v1536 = vmul.f32 1.0, %v1535
  %v1537 = vrcp.pop %v773
  %v1538 = vmul.f32 %v773, %v1537
  %v1539 = vsub.f32 1.0, %v1538
  %v1540 = vmul.f32 %v1537, %v1539
  %v1541 = vadd.f32 %v1537, %v1540
  %vm1542 = vweird.f32 %v773
  %vm1543 = vweird.f32 %v1537
  %vm1544 = vmor %vm1542, %vm1543
  %v1545 = vsel %vm1544, %v1537, %v1541
  %v1546 = vand.u32 2147483647, %v773
  %vm1547 = vcmp.eq.f32.partialorder %v1546, 8.507059e+37
  %v1548 = vand.u32 %v773, 2147483648
  %v1549 = vor.u32 1.1754944e-38, %v1548
  %v1550 = vsel %vm1547, %v1549, %v1545
  %v1551 = vmul.f32 1.0, %v1550
  %v1552 = vrcp.pop %v774
  %v1553 = vmul.f32 %v774, %v1552
  %v1554 = vsub.f32 1.0, %v1553
  %v1555 = vmul.f32 %v1552, %v1554
  %v1556 = vadd.f32 %v1552, %v1555
  %vm1557 = vweird.f32 %v774
  %vm1558 = vweird.f32 %v1552
  %vm1559 = vmor %vm1557, %vm1558
  %v1560 = vsel %vm1559, %v1552, %v1556
  %v1561 = vand.u32 2147483647, %v774
  %vm1562 = vcmp.eq.f32.partialorder %v1561, 8.507059e+37
  %v1563 = vand.u32 %v774, 2147483648
  %v1564 = vor.u32 1.1754944e-38, %v1563
  %v1565 = vsel %vm1562, %v1564, %v1560
  %v1566 = vmul.f32 1.0, %v1565
  %v1567 = vrcp.pop %v775
  %v1568 = vmul.f32 %v775, %v1567
  %v1569 = vsub.f32 1.0, %v1568
  %v1570 = vmul.f32 %v1567, %v1569
  %v1571 = vadd.f32 %v1567, %v1570
  %vm1572 = vweird.f32 %v775
  %vm1573 = vweird.f32 %v1567
  %vm1574 = vmor %vm1572, %vm1573
  %v1575 = vsel %vm1574, %v1567, %v1571
  %v1576 = vand.u32 2147483647, %v775
  %vm1577 = vcmp.eq.f32.partialorder %v1576, 8.507059e+37
  %v1578 = vand.u32 %v775, 2147483648
  %v1579 = vor.u32 1.1754944e-38, %v1578
  %v1580 = vsel %vm1577, %v1579, %v1575
  %v1581 = vmul.f32 1.0, %v1580
  %v1582 = vrcp.pop %v776
  %v1583 = vmul.f32 %v776, %v1582
  %v1584 = vsub.f32 1.0, %v1583
  %v1585 = vmul.f32 %v1582, %v1584
  %v1586 = vadd.f32 %v1582, %v1585
  %vm1587 = vweird.f32 %v776
  %vm1588 = vweird.f32 %v1582
  %vm1589 = vmor %vm1587, %vm1588
  %v1590 = vsel %vm1589, %v1582, %v1586
  %v1591 = vand.u32 2147483647, %v776
  %vm1592 = vcmp.eq.f32.partialorder %v1591, 8.507059e+37
  %v1593 = vand.u32 %v776, 2147483648
  %v1594 = vor.u32 1.1754944e-38, %v1593
  %v1595 = vsel %vm1592, %v1594, %v1590
  %v1596 = vmul.f32 1.0, %v1595
  %v1597 = vrcp.pop %v777
  %v1598 = vmul.f32 %v777, %v1597
  %v1599 = vsub.f32 1.0, %v1598
  %v1600 = vmul.f32 %v1597, %v1599
  %v1601 = vadd.f32 %v1597, %v1600
  %vm1602 = vweird.f32 %v777
  %vm1603 = vweird.f32 %v1597
  %vm1604 = vmor %vm1602, %vm1603
  %v1605 = vsel %vm1604, %v1597, %v1601
  %v1606 = vand.u32 2147483647, %v777
  %vm1607 = vcmp.eq.f32.partialorder %v1606, 8.507059e+37
  %v1608 = vand.u32 %v777, 2147483648
  %v1609 = vor.u32 1.1754944e-38, %v1608
  %v1610 = vsel %vm1607, %v1609, %v1605
  %v1611 = vmul.f32 1.0, %v1610
  %v1612 = vrcp.pop %v778
  %v1613 = vmul.f32 %v778, %v1612
  %v1614 = vsub.f32 1.0, %v1613
  %v1615 = vmul.f32 %v1612, %v1614
  %v1616 = vadd.f32 %v1612, %v1615
  %vm1617 = vweird.f32 %v778
  %vm1618 = vweird.f32 %v1612
  %vm1619 = vmor %vm1617, %vm1618
  %v1620 = vsel %vm1619, %v1612, %v1616
  %v1621 = vand.u32 2147483647, %v778
  %vm1622 = vcmp.eq.f32.partialorder %v1621, 8.507059e+37
  %v1623 = vand.u32 %v778, 2147483648
  %v1624 = vor.u32 1.1754944e-38, %v1623
  %v1625 = vsel %vm1622, %v1624, %v1620
  %v1626 = vmul.f32 1.0, %v1625
  %v1627 = vrcp.pop %v779
  %v1628 = vmul.f32 %v779, %v1627
  %v1629 = vsub.f32 1.0, %v1628
  %v1630 = vmul.f32 %v1627, %v1629
  %v1631 = vadd.f32 %v1627, %v1630
  %vm1632 = vweird.f32 %v779
  %vm1633 = vweird.f32 %v1627
  %vm1634 = vmor %vm1632, %vm1633
  %v1635 = vsel %vm1634, %v1627, %v1631
  %v1636 = vand.u32 2147483647, %v779
  %vm1637 = vcmp.eq.f32.partialorder %v1636, 8.507059e+37
  %v1638 = vand.u32 %v779, 2147483648
  %v1639 = vor.u32 1.1754944e-38, %v1638
  %v1640 = vsel %vm1637, %v1639, %v1635
  %v1641 = vmul.f32 1.0, %v1640
  %v1642 = vrcp.pop %v780
  %v1643 = vmul.f32 %v780, %v1642
  %v1644 = vsub.f32 1.0, %v1643
  %v1645 = vmul.f32 %v1642, %v1644
  %v1646 = vadd.f32 %v1642, %v1645
  %vm1647 = vweird.f32 %v780
  %vm1648 = vweird.f32 %v1642
  %vm1649 = vmor %vm1647, %vm1648
  %v1650 = vsel %vm1649, %v1642, %v1646
  %v1651 = vand.u32 2147483647, %v780
  %vm1652 = vcmp.eq.f32.partialorder %v1651, 8.507059e+37
  %v1653 = vand.u32 %v780, 2147483648
  %v1654 = vor.u32 1.1754944e-38, %v1653
  %v1655 = vsel %vm1652, %v1654, %v1650
  %v1656 = vmul.f32 1.0, %v1655
  %v1657 = vrcp.pop %v781
  %v1658 = vmul.f32 %v781, %v1657
  %v1659 = vsub.f32 1.0, %v1658
  %v1660 = vmul.f32 %v1657, %v1659
  %v1661 = vadd.f32 %v1657, %v1660
  %vm1662 = vweird.f32 %v781
  %vm1663 = vweird.f32 %v1657
  %vm1664 = vmor %vm1662, %vm1663
  %v1665 = vsel %vm1664, %v1657, %v1661
  %v1666 = vand.u32 2147483647, %v781
  %vm1667 = vcmp.eq.f32.partialorder %v1666, 8.507059e+37
  %v1668 = vand.u32 %v781, 2147483648
  %v1669 = vor.u32 1.1754944e-38, %v1668
  %v1670 = vsel %vm1667, %v1669, %v1665
  %v1671 = vmul.f32 1.0, %v1670
  %v1672 = vrcp.pop %v782
  %v1673 = vmul.f32 %v782, %v1672
  %v1674 = vsub.f32 1.0, %v1673
  %v1675 = vmul.f32 %v1672, %v1674
  %v1676 = vadd.f32 %v1672, %v1675
  %vm1677 = vweird.f32 %v782
  %vm1678 = vweird.f32 %v1672
  %vm1679 = vmor %vm1677, %vm1678
  %v1680 = vsel %vm1679, %v1672, %v1676
  %v1681 = vand.u32 2147483647, %v782
  %vm1682 = vcmp.eq.f32.partialorder %v1681, 8.507059e+37
  %v1683 = vand.u32 %v782, 2147483648
  %v1684 = vor.u32 1.1754944e-38, %v1683
  %v1685 = vsel %vm1682, %v1684, %v1680
  %v1686 = vmul.f32 1.0, %v1685
  %v1687 = vrcp.pop %v783
  %v1688 = vmul.f32 %v783, %v1687
  %v1689 = vsub.f32 1.0, %v1688
  %v1690 = vmul.f32 %v1687, %v1689
  %v1691 = vadd.f32 %v1687, %v1690
  %vm1692 = vweird.f32 %v783
  %vm1693 = vweird.f32 %v1687
  %vm1694 = vmor %vm1692, %vm1693
  %v1695 = vsel %vm1694, %v1687, %v1691
  %v1696 = vand.u32 2147483647, %v783
  %vm1697 = vcmp.eq.f32.partialorder %v1696, 8.507059e+37
  %v1698 = vand.u32 %v783, 2147483648
  %v1699 = vor.u32 1.1754944e-38, %v1698
  %v1700 = vsel %vm1697, %v1699, %v1695
  %v1701 = vmul.f32 1.0, %v1700
  %v1702 = vrcp.pop %v784
  %v1703 = vmul.f32 %v784, %v1702
  %v1704 = vsub.f32 1.0, %v1703
  %v1705 = vmul.f32 %v1702, %v1704
  %v1706 = vadd.f32 %v1702, %v1705
  %vm1707 = vweird.f32 %v784
  %vm1708 = vweird.f32 %v1702
  %vm1709 = vmor %vm1707, %vm1708
  %v1710 = vsel %vm1709, %v1702, %v1706
  %v1711 = vand.u32 2147483647, %v784
  %vm1712 = vcmp.eq.f32.partialorder %v1711, 8.507059e+37
  %v1713 = vand.u32 %v784, 2147483648
  %v1714 = vor.u32 1.1754944e-38, %v1713
  %v1715 = vsel %vm1712, %v1714, %v1710
  %v1716 = vmul.f32 1.0, %v1715
  %v1717 = vrcp.pop %v785
  %v1718 = vmul.f32 %v785, %v1717
  %v1719 = vsub.f32 1.0, %v1718
  %v1720 = vmul.f32 %v1717, %v1719
  %v1721 = vadd.f32 %v1717, %v1720
  %vm1722 = vweird.f32 %v785
  %vm1723 = vweird.f32 %v1717
  %vm1724 = vmor %vm1722, %vm1723
  %v1725 = vsel %vm1724, %v1717, %v1721
  %v1726 = vand.u32 2147483647, %v785
  %vm1727 = vcmp.eq.f32.partialorder %v1726, 8.507059e+37
  %v1728 = vand.u32 %v785, 2147483648
  %v1729 = vor.u32 1.1754944e-38, %v1728
  %v1730 = vsel %vm1727, %v1729, %v1725
  %v1731 = vmul.f32 1.0, %v1730
  %v1732 = vrcp.pop %v786
  %v1733 = vmul.f32 %v786, %v1732
  %v1734 = vsub.f32 1.0, %v1733
  %v1735 = vmul.f32 %v1732, %v1734
  %v1736 = vadd.f32 %v1732, %v1735
  %vm1737 = vweird.f32 %v786
  %vm1738 = vweird.f32 %v1732
  %vm1739 = vmor %vm1737, %vm1738
  %v1740 = vsel %vm1739, %v1732, %v1736
  %v1741 = vand.u32 2147483647, %v786
  %vm1742 = vcmp.eq.f32.partialorder %v1741, 8.507059e+37
  %v1743 = vand.u32 %v786, 2147483648
  %v1744 = vor.u32 1.1754944e-38, %v1743
  %v1745 = vsel %vm1742, %v1744, %v1740
  %v1746 = vmul.f32 1.0, %v1745
  %v1747 = vmul.f32 %v372, %v801
  %v1748 = vmul.f32 %v374, %v816
  %v1749 = vmul.f32 %v377, %v831
  %v1750 = vmul.f32 %v379, %v846
  %v1751 = vmul.f32 %v382, %v861
  %v1752 = vmul.f32 %v384, %v876
  %v1753 = vmul.f32 %v387, %v891
  %v1754 = vmul.f32 %v389, %v906
  %v1755 = vmul.f32 %v392, %v921
  %v1756 = vmul.f32 %v394, %v936
  %v1757 = vmul.f32 %v397, %v951
  %v1758 = vmul.f32 %v399, %v966
  %v1759 = vmul.f32 %v402, %v981
  %v1760 = vmul.f32 %v404, %v996
  %v1761 = vmul.f32 %v407, %v1011
  %v1762 = vmul.f32 %v409, %v1026
  %v1763 = vmul.f32 %v412, %v1041
  %v1764 = vmul.f32 %v414, %v1056
  %v1765 = vmul.f32 %v417, %v1071
  %v1766 = vmul.f32 %v419, %v1086
  %v1767 = vmul.f32 %v422, %v1101
  %v1768 = vmul.f32 %v424, %v1116
  %v1769 = vmul.f32 %v427, %v1131
  %v1770 = vmul.f32 %v429, %v1146
  %v1771 = vmul.f32 %v432, %v1161
  %v1772 = vmul.f32 %v434, %v1176
  %v1773 = vmul.f32 %v437, %v1191
  %v1774 = vmul.f32 %v439, %v1206
  %v1775 = vmul.f32 %v442, %v1221
  %v1776 = vmul.f32 %v444, %v1236
  %v1777 = vmul.f32 %v447, %v1251
  %v1778 = vmul.f32 %v449, %v1266
  %v1779 = vmul.f32 %v452, %v1281
  %v1780 = vmul.f32 %v454, %v1296
  %v1781 = vmul.f32 %v457, %v1311
  %v1782 = vmul.f32 %v459, %v1326
  %v1783 = vmul.f32 %v462, %v1341
  %v1784 = vmul.f32 %v464, %v1356
  %v1785 = vmul.f32 %v467, %v1371
  %v1786 = vmul.f32 %v469, %v1386
  %v1787 = vmul.f32 %v472, %v1401
  %v1788 = vmul.f32 %v474, %v1416
  %v1789 = vmul.f32 %v477, %v1431
  %v1790 = vmul.f32 %v479, %v1446
  %v1791 = vmul.f32 %v482, %v1461
  %v1792 = vmul.f32 %v484, %v1476
  %v1793 = vmul.f32 %v487, %v1491
  %v1794 = vmul.f32 %v489, %v1506
  %v1795 = vmul.f32 %v492, %v1521
  %v1796 = vmul.f32 %v494, %v1536
  %v1797 = vmul.f32 %v497, %v1551
  %v1798 = vmul.f32 %v499, %v1566
  %v1799 = vmul.f32 %v502, %v1581
  %v1800 = vmul.f32 %v504, %v1596
  %v1801 = vmul.f32 %v507, %v1611
  %v1802 = vmul.f32 %v509, %v1626
  %v1803 = vmul.f32 %v512, %v1641
  %v1804 = vmul.f32 %v514, %v1656
  %v1805 = vmul.f32 %v517, %v1671
  %v1806 = vmul.f32 %v519, %v1686
  %v1807 = vmul.f32 %v522, %v1701
  %v1808 = vmul.f32 %v524, %v1716
  %v1809 = vmul.f32 %v527, %v1731
  %v1810 = vmul.f32 %v529, %v1746
  %v1811 = vpack.c.bf16 %v1747, %v1747
  %v1812 = vpack.c.bf16 %v1748, %v1748
  %v1813 = vpack.c.bf16 %v1749, %v1749
  %v1814 = vpack.c.bf16 %v1750, %v1750
  %v1815 = vpack.c.bf16 %v1751, %v1751
  %v1816 = vpack.c.bf16 %v1752, %v1752
  %v1817 = vpack.c.bf16 %v1753, %v1753
  %v1818 = vpack.c.bf16 %v1754, %v1754
  %v1819 = vpack.c.bf16 %v1755, %v1755
  %v1820 = vpack.c.bf16 %v1756, %v1756
  %v1821 = vpack.c.bf16 %v1757, %v1757
  %v1822 = vpack.c.bf16 %v1758, %v1758
  %v1823 = vpack.c.bf16 %v1759, %v1759
  %v1824 = vpack.c.bf16 %v1760, %v1760
  %v1825 = vpack.c.bf16 %v1761, %v1761
  %v1826 = vpack.c.bf16 %v1762, %v1762
  %v1827 = vpack.c.bf16 %v1763, %v1763
  %v1828 = vpack.c.bf16 %v1764, %v1764
  %v1829 = vpack.c.bf16 %v1765, %v1765
  %v1830 = vpack.c.bf16 %v1766, %v1766
  %v1831 = vpack.c.bf16 %v1767, %v1767
  %v1832 = vpack.c.bf16 %v1768, %v1768
  %v1833 = vpack.c.bf16 %v1769, %v1769
  %v1834 = vpack.c.bf16 %v1770, %v1770
  %v1835 = vpack.c.bf16 %v1771, %v1771
  %v1836 = vpack.c.bf16 %v1772, %v1772
  %v1837 = vpack.c.bf16 %v1773, %v1773
  %v1838 = vpack.c.bf16 %v1774, %v1774
  %v1839 = vpack.c.bf16 %v1775, %v1775
  %v1840 = vpack.c.bf16 %v1776, %v1776
  %v1841 = vpack.c.bf16 %v1777, %v1777
  %v1842 = vpack.c.bf16 %v1778, %v1778
  %v1843 = vpack.c.bf16 %v1779, %v1779
  %v1844 = vpack.c.bf16 %v1780, %v1780
  %v1845 = vpack.c.bf16 %v1781, %v1781
  %v1846 = vpack.c.bf16 %v1782, %v1782
  %v1847 = vpack.c.bf16 %v1783, %v1783
  %v1848 = vpack.c.bf16 %v1784, %v1784
  %v1849 = vpack.c.bf16 %v1785, %v1785
  %v1850 = vpack.c.bf16 %v1786, %v1786
  %v1851 = vpack.c.bf16 %v1787, %v1787
  %v1852 = vpack.c.bf16 %v1788, %v1788
  %v1853 = vpack.c.bf16 %v1789, %v1789
  %v1854 = vpack.c.bf16 %v1790, %v1790
  %v1855 = vpack.c.bf16 %v1791, %v1791
  %v1856 = vpack.c.bf16 %v1792, %v1792
  %v1857 = vpack.c.bf16 %v1793, %v1793
  %v1858 = vpack.c.bf16 %v1794, %v1794
  %v1859 = vpack.c.bf16 %v1795, %v1795
  %v1860 = vpack.c.bf16 %v1796, %v1796
  %v1861 = vpack.c.bf16 %v1797, %v1797
  %v1862 = vpack.c.bf16 %v1798, %v1798
  %v1863 = vpack.c.bf16 %v1799, %v1799
  %v1864 = vpack.c.bf16 %v1800, %v1800
  %v1865 = vpack.c.bf16 %v1801, %v1801
  %v1866 = vpack.c.bf16 %v1802, %v1802
  %v1867 = vpack.c.bf16 %v1803, %v1803
  %v1868 = vpack.c.bf16 %v1804, %v1804
  %v1869 = vpack.c.bf16 %v1805, %v1805
  %v1870 = vpack.c.bf16 %v1806, %v1806
  %v1871 = vpack.c.bf16 %v1807, %v1807
  %v1872 = vpack.c.bf16 %v1808, %v1808
  %v1873 = vpack.c.bf16 %v1809, %v1809
  %v1874 = vpack.c.bf16 %v1810, %v1810
  %vm1875 = vcmask 257024
  %1876 = vst.msk [vmem:[%s3] sm:$0xf] %vm1875, %v1811
  %1877 = vst.msk [vmem:[%s3 + $0x4] sm:$0xf] %vm1875, %v1812
  %1878 = vst.msk [vmem:[%s3 + $0x8] sm:$0xf] %vm1875, %v1813
  %1879 = vst.msk [vmem:[%s3 + $0xc] sm:$0xf] %vm1875, %v1814
  %1880 = vst.msk [vmem:[%s3 + $0x10] sm:$0xf] %vm1875, %v1815
  %1881 = vst.msk [vmem:[%s3 + $0x14] sm:$0xf] %vm1875, %v1816
  %1882 = vst.msk [vmem:[%s3 + $0x18] sm:$0xf] %vm1875, %v1817
  %1883 = vst.msk [vmem:[%s3 + $0x1c] sm:$0xf] %vm1875, %v1818
  %1884 = vst.msk [vmem:[%s3 + $0x20] sm:$0xf] %vm1875, %v1819
  %1885 = vst.msk [vmem:[%s3 + $0x24] sm:$0xf] %vm1875, %v1820
  %1886 = vst.msk [vmem:[%s3 + $0x28] sm:$0xf] %vm1875, %v1821
  %1887 = vst.msk [vmem:[%s3 + $0x2c] sm:$0xf] %vm1875, %v1822
  %1888 = vst.msk [vmem:[%s3 + $0x30] sm:$0xf] %vm1875, %v1823
  %1889 = vst.msk [vmem:[%s3 + $0x34] sm:$0xf] %vm1875, %v1824
  %1890 = vst.msk [vmem:[%s3 + $0x38] sm:$0xf] %vm1875, %v1825
  %1891 = vst.msk [vmem:[%s3 + $0x3c] sm:$0xf] %vm1875, %v1826
  %1892 = vst.msk [vmem:[%s3 + $0x40] sm:$0xf] %vm1875, %v1827
  %1893 = vst.msk [vmem:[%s3 + $0x44] sm:$0xf] %vm1875, %v1828
  %1894 = vst.msk [vmem:[%s3 + $0x48] sm:$0xf] %vm1875, %v1829
  %1895 = vst.msk [vmem:[%s3 + $0x4c] sm:$0xf] %vm1875, %v1830
  %1896 = vst.msk [vmem:[%s3 + $0x50] sm:$0xf] %vm1875, %v1831
  %1897 = vst.msk [vmem:[%s3 + $0x54] sm:$0xf] %vm1875, %v1832
  %1898 = vst.msk [vmem:[%s3 + $0x58] sm:$0xf] %vm1875, %v1833
  %1899 = vst.msk [vmem:[%s3 + $0x5c] sm:$0xf] %vm1875, %v1834
  %1900 = vst.msk [vmem:[%s3 + $0x60] sm:$0xf] %vm1875, %v1835
  %1901 = vst.msk [vmem:[%s3 + $0x64] sm:$0xf] %vm1875, %v1836
  %1902 = vst.msk [vmem:[%s3 + $0x68] sm:$0xf] %vm1875, %v1837
  %1903 = vst.msk [vmem:[%s3 + $0x6c] sm:$0xf] %vm1875, %v1838
  %1904 = vst.msk [vmem:[%s3 + $0x70] sm:$0xf] %vm1875, %v1839
  %1905 = vst.msk [vmem:[%s3 + $0x74] sm:$0xf] %vm1875, %v1840
  %1906 = vst.msk [vmem:[%s3 + $0x78] sm:$0xf] %vm1875, %v1841
  %1907 = vst.msk [vmem:[%s3 + $0x7c] sm:$0xf] %vm1875, %v1842
  %1908 = vst.msk [vmem:[%s3 + $0x80] sm:$0xf] %vm1875, %v1843
  %1909 = vst.msk [vmem:[%s3 + $0x84] sm:$0xf] %vm1875, %v1844
  %1910 = vst.msk [vmem:[%s3 + $0x88] sm:$0xf] %vm1875, %v1845
  %1911 = vst.msk [vmem:[%s3 + $0x8c] sm:$0xf] %vm1875, %v1846
  %1912 = vst.msk [vmem:[%s3 + $0x90] sm:$0xf] %vm1875, %v1847
  %1913 = vst.msk [vmem:[%s3 + $0x94] sm:$0xf] %vm1875, %v1848
  %1914 = vst.msk [vmem:[%s3 + $0x98] sm:$0xf] %vm1875, %v1849
  %1915 = vst.msk [vmem:[%s3 + $0x9c] sm:$0xf] %vm1875, %v1850
  %1916 = vst.msk [vmem:[%s3 + $0xa0] sm:$0xf] %vm1875, %v1851
  %1917 = vst.msk [vmem:[%s3 + $0xa4] sm:$0xf] %vm1875, %v1852
  %1918 = vst.msk [vmem:[%s3 + $0xa8] sm:$0xf] %vm1875, %v1853
  %1919 = vst.msk [vmem:[%s3 + $0xac] sm:$0xf] %vm1875, %v1854
  %1920 = vst.msk [vmem:[%s3 + $0xb0] sm:$0xf] %vm1875, %v1855
  %1921 = vst.msk [vmem:[%s3 + $0xb4] sm:$0xf] %vm1875, %v1856
  %1922 = vst.msk [vmem:[%s3 + $0xb8] sm:$0xf] %vm1875, %v1857
  %1923 = vst.msk [vmem:[%s3 + $0xbc] sm:$0xf] %vm1875, %v1858
  %1924 = vst.msk [vmem:[%s3 + $0xc0] sm:$0xf] %vm1875, %v1859
  %1925 = vst.msk [vmem:[%s3 + $0xc4] sm:$0xf] %vm1875, %v1860
  %1926 = vst.msk [vmem:[%s3 + $0xc8] sm:$0xf] %vm1875, %v1861
  %1927 = vst.msk [vmem:[%s3 + $0xcc] sm:$0xf] %vm1875, %v1862
  %1928 = vst.msk [vmem:[%s3 + $0xd0] sm:$0xf] %vm1875, %v1863
  %1929 = vst.msk [vmem:[%s3 + $0xd4] sm:$0xf] %vm1875, %v1864
  %1930 = vst.msk [vmem:[%s3 + $0xd8] sm:$0xf] %vm1875, %v1865
  %1931 = vst.msk [vmem:[%s3 + $0xdc] sm:$0xf] %vm1875, %v1866
  %1932 = vst.msk [vmem:[%s3 + $0xe0] sm:$0xf] %vm1875, %v1867
  %1933 = vst.msk [vmem:[%s3 + $0xe4] sm:$0xf] %vm1875, %v1868
  %1934 = vst.msk [vmem:[%s3 + $0xe8] sm:$0xf] %vm1875, %v1869
  %1935 = vst.msk [vmem:[%s3 + $0xec] sm:$0xf] %vm1875, %v1870
  %1936 = vst.msk [vmem:[%s3 + $0xf0] sm:$0xf] %vm1875, %v1871
  %1937 = vst.msk [vmem:[%s3 + $0xf4] sm:$0xf] %vm1875, %v1872
  %1938 = vst.msk [vmem:[%s3 + $0xf8] sm:$0xf] %vm1875, %v1873
  %1939 = vst.msk [vmem:[%s3 + $0xfc] sm:$0xf] %vm1875, %v1874
  // Predicated region
  $region14: #{_linear.1} parent=0 // pred_check
    _
  $region15: #{_linear.1} parent=0 // pred_check_branch
    %1941 = sbr.rel (0) target = $region17
  $region16: #{_linear.1} parent=0 // pred_region
    _
  $region17: #{_linear.1} parent=0 // pred_fallthru
    _
  // Predicated region
  $region18: #{_linear.1} parent=0 // pred_check
    _
  $region19: #{_linear.1} parent=0 // pred_check_branch
    %1943 = sbr.rel (0) target = $region21
  $region20: #{_linear.1} parent=0 // pred_region
    _
  $region21: #{_linear.1} parent=0 // pred_fallthru
    _

</llo_original>
